<compile_context>
chip_gen: v6e
topology: v6e:2x2x1
jax: 0.10.0
libtpu: 0.0.40
codegen_flags: <defaults>
</compile_context>

<pallas_src>
import functools

import jax
import jax.numpy as jnp
from jax.experimental import pallas as pl
from jax.experimental.pallas import tpu as pltpu

N_IN, H1, H2, N_OUT = 128, 256, 512, 784
SLAB = 128
N_OUT_PAD = 896  # 7 * 128: lane-dense layer-3 weight columns (784 is ragged)


def _leaky_relu(x, slope=0.2):
    return jnp.where(x > 0, x, slope * x)


def _round_up(n, m):
    return (n + m - 1) // m * m


def _cdiv(a, b):
    return -(-a // b)


def generator_kernel(x_ref, w1_ref, b1_ref, w2_ref, b2_ref, w3_ref, b3_ref,
                     o_ref):
    # Layers 1/2: bf16 operands on the MXU, f32 accumulation, f32 element-wise.
    x = x_ref[...].astype(jnp.bfloat16)

    h = jnp.dot(x, w1_ref[...], preferred_element_type=jnp.float32)
    h = _leaky_relu(h + b1_ref[...])

    h = jnp.dot(h.astype(jnp.bfloat16), w2_ref[...],
                preferred_element_type=jnp.float32)
    h2 = _leaky_relu(h + b2_ref[...]).astype(jnp.bfloat16)

    # Layer 3: 128-lane output-column slabs.  The MXU matmul of slab k+1
    # overlaps the EUP tanh of slab k; live f32 intermediate is (TB, 128).
    n_full = N_OUT // SLAB                      # 6 full slabs
    for s in range(N_OUT_PAD // SLAB):          # 7 slabs, statically unrolled
        c0 = s * SLAB
        y = jnp.dot(h2, w3_ref[:, c0:c0 + SLAB],
                    preferred_element_type=jnp.float32)
        y = jnp.tanh(y + b3_ref[:, c0:c0 + SLAB])
        if s < n_full:
            o_ref[:, c0:c0 + SLAB] = y
        else:
            # Last slab: only 784 - 768 = 16 valid columns (masked store).
            o_ref[:, c0:N_OUT] = y[:, :N_OUT - c0]


@functools.partial(jax.jit, static_argnames=("max_tb",))
def generator_forward(x, kernel_params, max_tb=512):
    """x: (B, 128) float32 -> (B, 784) float32.

    `kernel_params` must come from prepare_params() (bf16 weights, padded w3).
    """
    w1, b1, w2, b2, w3p, b3p = kernel_params
    B = x.shape[0]

    # Batch tiling: minimize padding (TB = ceil(B / num_tiles) rounded up to
    # 8 sublanes) and guarantee >= 2 grid steps for non-tiny batches so both
    # v7x TensorCores run under dimension_semantics=("parallel",).
    num_tiles = _cdiv(B, max_tb)
    if B >= 16:
        num_tiles = max(num_tiles, 2)
    TB = _round_up(_cdiv(B, num_tiles), 8)
    B_pad = num_tiles * TB
    if B_pad != B:
        x = jnp.pad(x, ((0, B_pad - B), (0, 0)))

    # Weights/biases: same block every grid step -> stay resident in VMEM.
    const = lambda shape: pl.BlockSpec(shape, lambda i: (0, 0))

    cost = pl.CostEstimate(
        flops=2 * B_pad * (N_IN * H1 + H1 * H2 + H2 * N_OUT_PAD),
        transcendentals=B_pad * N_OUT_PAD,
        bytes_accessed=(4 * B_pad * (N_IN + N_OUT)                 # x, out (f32)
                        + 2 * (N_IN * H1 + H1 * H2 + H2 * N_OUT_PAD)  # bf16 W
                        + 4 * (H1 + H2 + N_OUT_PAD)),              # f32 biases
    )

    out = pl.pallas_call(
        generator_kernel,
        out_shape=jax.ShapeDtypeStruct((B_pad, N_OUT), jnp.float32),
        grid=(num_tiles,),
        in_specs=[
            pl.BlockSpec((TB, N_IN), lambda i: (i, 0)),
            const((N_IN, H1)), const((1, H1)),
            const((H1, H2)), const((1, H2)),
            const((H2, N_OUT_PAD)), const((1, N_OUT_PAD)),
        ],
        out_specs=pl.BlockSpec((TB, N_OUT), lambda i: (i, 0)),
        compiler_params=pltpu.CompilerParams(
            dimension_semantics=("parallel",),   # megacore on v7x
            vmem_limit_bytes=32 << 20,           # TB=512 footprint ~10 MiB
        ),
        cost_estimate=cost,
    )(x, w1, b1, w2, b2, w3p, b3p)

    # Only the batch padding (if any) needs slicing; columns are already 784.
    if B_pad != B:
        out = out[:B]
    return out


def init_params(key):
    """Deterministic f32 init mimicking torch.nn.Linear default:
    U(-1/sqrt(fan_in), 1/sqrt(fan_in)) for both weights and biases."""
    ks = jax.random.split(key, 6)

    def linear(kw, kb, fan_in, fan_out):
        bound = 1.0 / jnp.sqrt(jnp.float32(fan_in))
        w = jax.random.uniform(kw, (fan_in, fan_out), jnp.float32, -bound, bound)
        b = jax.random.uniform(kb, (1, fan_out), jnp.float32, -bound, bound)
        return w, b

    w1, b1 = linear(ks[0], ks[1], N_IN, H1)
    w2, b2 = linear(ks[2], ks[3], H1, H2)
    w3, b3 = linear(ks[4], ks[5], H2, N_OUT)
    return (w1, b1, w2, b2, w3, b3)


def prepare_params(params):
    """One-time conversion to kernel format: bf16 weights, f32 biases,
    layer-3 weight/bias zero-padded 784 -> 896 columns.  Do NOT call per
    forward pass."""
    w1, b1, w2, b2, w3, b3 = params
    w3p = jnp.pad(w3, ((0, 0), (0, N_OUT_PAD - N_OUT)))
    b3p = jnp.pad(b3, ((0, 0), (0, N_OUT_PAD - N_OUT)))
    return (w1.astype(jnp.bfloat16), b1,
            w2.astype(jnp.bfloat16), b2,
            w3p.astype(jnp.bfloat16), b3p)


def reference_forward(x, kernel_params):
    """Pure-JAX reference matching the kernel's numerics exactly
    (bf16 matmul operands, f32 accumulation, f32 element-wise math)."""
    w1, b1, w2, b2, w3p, b3p = kernel_params
    f32 = jnp.float32
    h = _leaky_relu(
        jnp.dot(x.astype(jnp.bfloat16), w1, preferred_element_type=f32) + b1)
    h = _leaky_relu(
        jnp.dot(h.astype(jnp.bfloat16), w2, preferred_element_type=f32) + b2)
    y = jnp.tanh(
        jnp.dot(h.astype(jnp.bfloat16), w3p, preferred_element_type=f32) + b3p)
    return y[:, :N_OUT]


if __name__ == "__main__":
    key = jax.random.PRNGKey(0)
    kx, kp = jax.random.split(key)
    params = prepare_params(init_params(kp))

    # Small batch: single-tile path (B < 16 keeps grid=(1,)).
    B = 8
    x = jax.random.normal(kx, (B, N_IN), jnp.float32)
    out = jax.block_until_ready(generator_forward(x, params))
    ref = reference_forward(x, params)
    assert out.shape == (B, N_OUT)
    assert jnp.allclose(out, ref, atol=5e-3, rtol=5e-3)

    # Batch that is not a tile multiple: exercises minimal batch padding
    # (300 -> 304) and the 2-step parallel grid (TB = 152, both v7x TCs).
    B2 = 300
    x2 = jax.random.normal(kx, (B2, N_IN), jnp.float32)
    out2 = jax.block_until_ready(generator_forward(x2, params))
    ref2 = reference_forward(x2, params)
    assert out2.shape == (B2, N_OUT)
    assert jnp.allclose(out2, ref2, atol=5e-3, rtol=5e-3)

    print("KERNEL_OK")
</pallas_src>

<mosaic_0001>
module attributes {stable_mosaic.version = 11 : i64} {
  func.func @generator_kernel(%arg0: i32, %arg1: memref<8x128xf32, #tpu.memory_space<vmem>>, %arg2: memref<128x256xbf16, #tpu.memory_space<vmem>>, %arg3: memref<1x256xf32, #tpu.memory_space<vmem>>, %arg4: memref<256x512xbf16, #tpu.memory_space<vmem>>, %arg5: memref<1x512xf32, #tpu.memory_space<vmem>>, %arg6: memref<512x896xbf16, #tpu.memory_space<vmem>>, %arg7: memref<1x896xf32, #tpu.memory_space<vmem>>, %arg8: memref<8x784xf32, #tpu.memory_space<vmem>>) attributes {dimension_semantics = [#tpu.dimension_semantics<parallel>], iteration_bounds = array<i64: 1>, scalar_prefetch = 0 : i64, scratch_operands = 0 : i64, tpu.core_type = #tpu.core_type<tc>, window_params = [{transform_indices = @transform_0, window_bounds = array<i64: 8, 128>}, {pipeline_mode = #tpu.pipeline_mode<synchronous>, transform_indices = @transform_1, window_bounds = array<i64: 128, 256>}, {pipeline_mode = #tpu.pipeline_mode<synchronous>, transform_indices = @transform_2, window_bounds = array<i64: 1, 256>}, {pipeline_mode = #tpu.pipeline_mode<synchronous>, transform_indices = @transform_3, window_bounds = array<i64: 256, 512>}, {pipeline_mode = #tpu.pipeline_mode<synchronous>, transform_indices = @transform_4, window_bounds = array<i64: 1, 512>}, {pipeline_mode = #tpu.pipeline_mode<synchronous>, transform_indices = @transform_5, window_bounds = array<i64: 512, 896>}, {pipeline_mode = #tpu.pipeline_mode<synchronous>, transform_indices = @transform_6, window_bounds = array<i64: 1, 896>}, {transform_indices = @transform_7, window_bounds = array<i64: 8, 784>}]} {
    %c0 = arith.constant 0 : index
    %c0_0 = arith.constant 0 : index
    %0 = vector.load %arg1[%c0, %c0_0] : memref<8x128xf32, #tpu.memory_space<vmem>>, vector<8x128xf32>
    %1 = arith.truncf %0 : vector<8x128xf32> to vector<8x128xbf16>
    %c0_1 = arith.constant 0 : index
    %c0_2 = arith.constant 0 : index
    %2 = vector.load %arg2[%c0_1, %c0_2] : memref<128x256xbf16, #tpu.memory_space<vmem>>, vector<128x256xbf16>
    %cst = arith.constant dense<0.000000e+00> : vector<8x256xf32>
    %3 = tpu.matmul %1, %2, %cst {dimension_numbers = #tpu.dot_dimension_numbers<[1], [0], [0], [1], [0, 0, 1, 1], [], []>} : vector<8x128xbf16>, vector<128x256xbf16>, vector<8x256xf32> -> vector<8x256xf32>
    %c0_3 = arith.constant 0 : index
    %c0_4 = arith.constant 0 : index
    %4 = vector.load %arg3[%c0_3, %c0_4] : memref<1x256xf32, #tpu.memory_space<vmem>>, vector<1x256xf32>
    %5 = vector.broadcast %4 : vector<1x256xf32> to vector<8x256xf32>
    %6 = arith.addf %3, %5 : vector<8x256xf32>
    %cst_5 = arith.constant 0.000000e+00 : f32
    %7 = vector.broadcast %cst_5 : f32 to vector<8x256xf32>
    %8 = arith.cmpf ogt, %6, %7 : vector<8x256xf32>
    %cst_6 = arith.constant 2.000000e-01 : f32
    %9 = vector.broadcast %cst_6 : f32 to vector<8x256xf32>
    %10 = arith.mulf %9, %6 : vector<8x256xf32>
    %11 = arith.select %8, %6, %10 : vector<8x256xi1>, vector<8x256xf32>
    %12 = arith.truncf %11 : vector<8x256xf32> to vector<8x256xbf16>
    %c0_7 = arith.constant 0 : index
    %c0_8 = arith.constant 0 : index
    %13 = vector.load %arg4[%c0_7, %c0_8] : memref<256x512xbf16, #tpu.memory_space<vmem>>, vector<256x512xbf16>
    %cst_9 = arith.constant dense<0.000000e+00> : vector<8x512xf32>
    %14 = tpu.matmul %12, %13, %cst_9 {dimension_numbers = #tpu.dot_dimension_numbers<[1], [0], [0], [1], [0, 0, 1, 1], [], []>} : vector<8x256xbf16>, vector<256x512xbf16>, vector<8x512xf32> -> vector<8x512xf32>
    %c0_10 = arith.constant 0 : index
    %c0_11 = arith.constant 0 : index
    %15 = vector.load %arg5[%c0_10, %c0_11] : memref<1x512xf32, #tpu.memory_space<vmem>>, vector<1x512xf32>
    %16 = vector.broadcast %15 : vector<1x512xf32> to vector<8x512xf32>
    %17 = arith.addf %14, %16 : vector<8x512xf32>
    %cst_12 = arith.constant 0.000000e+00 : f32
    %18 = vector.broadcast %cst_12 : f32 to vector<8x512xf32>
    %19 = arith.cmpf ogt, %17, %18 : vector<8x512xf32>
    %cst_13 = arith.constant 2.000000e-01 : f32
    %20 = vector.broadcast %cst_13 : f32 to vector<8x512xf32>
    %21 = arith.mulf %20, %17 : vector<8x512xf32>
    %22 = arith.select %19, %17, %21 : vector<8x512xi1>, vector<8x512xf32>
    %23 = arith.truncf %22 : vector<8x512xf32> to vector<8x512xbf16>
    %c0_14 = arith.constant 0 : index
    %c0_15 = arith.constant 0 : index
    %24 = vector.load %arg6[%c0_14, %c0_15] : memref<512x896xbf16, #tpu.memory_space<vmem>>, vector<512x128xbf16>
    %cst_16 = arith.constant dense<0.000000e+00> : vector<8x128xf32>
    %25 = tpu.matmul %23, %24, %cst_16 {dimension_numbers = #tpu.dot_dimension_numbers<[1], [0], [0], [1], [0, 0, 1, 1], [], []>} : vector<8x512xbf16>, vector<512x128xbf16>, vector<8x128xf32> -> vector<8x128xf32>
    %c0_17 = arith.constant 0 : index
    %c0_18 = arith.constant 0 : index
    %26 = vector.load %arg7[%c0_17, %c0_18] : memref<1x896xf32, #tpu.memory_space<vmem>>, vector<1x128xf32>
    %27 = vector.broadcast %26 : vector<1x128xf32> to vector<8x128xf32>
    %28 = arith.addf %25, %27 : vector<8x128xf32>
    %29 = math.tanh %28 : vector<8x128xf32>
    %c0_19 = arith.constant 0 : index
    %c0_20 = arith.constant 0 : index
    %30 = vector.load %arg8[%c0_19, %c0_20] : memref<8x784xf32, #tpu.memory_space<vmem>>, vector<8x128xf32>
    tpu.vector_store %arg8[%c0_19, %c0_20], %29 {strides = array<i32>} : memref<8x784xf32, #tpu.memory_space<vmem>>, vector<8x128xf32>,
    %c0_21 = arith.constant 0 : index
    %c128 = arith.constant 128 : index
    %31 = vector.load %arg6[%c0_21, %c128] : memref<512x896xbf16, #tpu.memory_space<vmem>>, vector<512x128xbf16>
    %cst_22 = arith.constant dense<0.000000e+00> : vector<8x128xf32>
    %32 = tpu.matmul %23, %31, %cst_22 {dimension_numbers = #tpu.dot_dimension_numbers<[1], [0], [0], [1], [0, 0, 1, 1], [], []>} : vector<8x512xbf16>, vector<512x128xbf16>, vector<8x128xf32> -> vector<8x128xf32>
    %c0_23 = arith.constant 0 : index
    %c128_24 = arith.constant 128 : index
    %33 = vector.load %arg7[%c0_23, %c128_24] : memref<1x896xf32, #tpu.memory_space<vmem>>, vector<1x128xf32>
    %34 = vector.broadcast %33 : vector<1x128xf32> to vector<8x128xf32>
    %35 = arith.addf %32, %34 : vector<8x128xf32>
    %36 = math.tanh %35 : vector<8x128xf32>
    %c0_25 = arith.constant 0 : index
    %c128_26 = arith.constant 128 : index
    %37 = vector.load %arg8[%c0_25, %c128_26] : memref<8x784xf32, #tpu.memory_space<vmem>>, vector<8x128xf32>
    tpu.vector_store %arg8[%c0_25, %c128_26], %36 {strides = array<i32>} : memref<8x784xf32, #tpu.memory_space<vmem>>, vector<8x128xf32>,
    %c0_27 = arith.constant 0 : index
    %c256 = arith.constant 256 : index
    %38 = vector.load %arg6[%c0_27, %c256] : memref<512x896xbf16, #tpu.memory_space<vmem>>, vector<512x128xbf16>
    %cst_28 = arith.constant dense<0.000000e+00> : vector<8x128xf32>
    %39 = tpu.matmul %23, %38, %cst_28 {dimension_numbers = #tpu.dot_dimension_numbers<[1], [0], [0], [1], [0, 0, 1, 1], [], []>} : vector<8x512xbf16>, vector<512x128xbf16>, vector<8x128xf32> -> vector<8x128xf32>
    %c0_29 = arith.constant 0 : index
    %c256_30 = arith.constant 256 : index
    %40 = vector.load %arg7[%c0_29, %c256_30] : memref<1x896xf32, #tpu.memory_space<vmem>>, vector<1x128xf32>
    %41 = vector.broadcast %40 : vector<1x128xf32> to vector<8x128xf32>
    %42 = arith.addf %39, %41 : vector<8x128xf32>
    %43 = math.tanh %42 : vector<8x128xf32>
    %c0_31 = arith.constant 0 : index
    %c256_32 = arith.constant 256 : index
    %44 = vector.load %arg8[%c0_31, %c256_32] : memref<8x784xf32, #tpu.memory_space<vmem>>, vector<8x128xf32>
    tpu.vector_store %arg8[%c0_31, %c256_32], %43 {strides = array<i32>} : memref<8x784xf32, #tpu.memory_space<vmem>>, vector<8x128xf32>,
    %c0_33 = arith.constant 0 : index
    %c384 = arith.constant 384 : index
    %45 = vector.load %arg6[%c0_33, %c384] : memref<512x896xbf16, #tpu.memory_space<vmem>>, vector<512x128xbf16>
    %cst_34 = arith.constant dense<0.000000e+00> : vector<8x128xf32>
    %46 = tpu.matmul %23, %45, %cst_34 {dimension_numbers = #tpu.dot_dimension_numbers<[1], [0], [0], [1], [0, 0, 1, 1], [], []>} : vector<8x512xbf16>, vector<512x128xbf16>, vector<8x128xf32> -> vector<8x128xf32>
    %c0_35 = arith.constant 0 : index
    %c384_36 = arith.constant 384 : index
    %47 = vector.load %arg7[%c0_35, %c384_36] : memref<1x896xf32, #tpu.memory_space<vmem>>, vector<1x128xf32>
    %48 = vector.broadcast %47 : vector<1x128xf32> to vector<8x128xf32>
    %49 = arith.addf %46, %48 : vector<8x128xf32>
    %50 = math.tanh %49 : vector<8x128xf32>
    %c0_37 = arith.constant 0 : index
    %c384_38 = arith.constant 384 : index
    %51 = vector.load %arg8[%c0_37, %c384_38] : memref<8x784xf32, #tpu.memory_space<vmem>>, vector<8x128xf32>
    tpu.vector_store %arg8[%c0_37, %c384_38], %50 {strides = array<i32>} : memref<8x784xf32, #tpu.memory_space<vmem>>, vector<8x128xf32>,
    %c0_39 = arith.constant 0 : index
    %c512 = arith.constant 512 : index
    %52 = vector.load %arg6[%c0_39, %c512] : memref<512x896xbf16, #tpu.memory_space<vmem>>, vector<512x128xbf16>
    %cst_40 = arith.constant dense<0.000000e+00> : vector<8x128xf32>
    %53 = tpu.matmul %23, %52, %cst_40 {dimension_numbers = #tpu.dot_dimension_numbers<[1], [0], [0], [1], [0, 0, 1, 1], [], []>} : vector<8x512xbf16>, vector<512x128xbf16>, vector<8x128xf32> -> vector<8x128xf32>
    %c0_41 = arith.constant 0 : index
    %c512_42 = arith.constant 512 : index
    %54 = vector.load %arg7[%c0_41, %c512_42] : memref<1x896xf32, #tpu.memory_space<vmem>>, vector<1x128xf32>
    %55 = vector.broadcast %54 : vector<1x128xf32> to vector<8x128xf32>
    %56 = arith.addf %53, %55 : vector<8x128xf32>
    %57 = math.tanh %56 : vector<8x128xf32>
    %c0_43 = arith.constant 0 : index
    %c512_44 = arith.constant 512 : index
    %58 = vector.load %arg8[%c0_43, %c512_44] : memref<8x784xf32, #tpu.memory_space<vmem>>, vector<8x128xf32>
    tpu.vector_store %arg8[%c0_43, %c512_44], %57 {strides = array<i32>} : memref<8x784xf32, #tpu.memory_space<vmem>>, vector<8x128xf32>,
    %c0_45 = arith.constant 0 : index
    %c640 = arith.constant 640 : index
    %59 = vector.load %arg6[%c0_45, %c640] : memref<512x896xbf16, #tpu.memory_space<vmem>>, vector<512x128xbf16>
    %cst_46 = arith.constant dense<0.000000e+00> : vector<8x128xf32>
    %60 = tpu.matmul %23, %59, %cst_46 {dimension_numbers = #tpu.dot_dimension_numbers<[1], [0], [0], [1], [0, 0, 1, 1], [], []>} : vector<8x512xbf16>, vector<512x128xbf16>, vector<8x128xf32> -> vector<8x128xf32>
    %c0_47 = arith.constant 0 : index
    %c640_48 = arith.constant 640 : index
    %61 = vector.load %arg7[%c0_47, %c640_48] : memref<1x896xf32, #tpu.memory_space<vmem>>, vector<1x128xf32>
    %62 = vector.broadcast %61 : vector<1x128xf32> to vector<8x128xf32>
    %63 = arith.addf %60, %62 : vector<8x128xf32>
    %64 = math.tanh %63 : vector<8x128xf32>
    %c0_49 = arith.constant 0 : index
    %c640_50 = arith.constant 640 : index
    %65 = vector.load %arg8[%c0_49, %c640_50] : memref<8x784xf32, #tpu.memory_space<vmem>>, vector<8x128xf32>
    tpu.vector_store %arg8[%c0_49, %c640_50], %64 {strides = array<i32>} : memref<8x784xf32, #tpu.memory_space<vmem>>, vector<8x128xf32>,
    %c0_51 = arith.constant 0 : index
    %c768 = arith.constant 768 : index
    %66 = vector.load %arg6[%c0_51, %c768] : memref<512x896xbf16, #tpu.memory_space<vmem>>, vector<512x128xbf16>
    %cst_52 = arith.constant dense<0.000000e+00> : vector<8x128xf32>
    %67 = tpu.matmul %23, %66, %cst_52 {dimension_numbers = #tpu.dot_dimension_numbers<[1], [0], [0], [1], [0, 0, 1, 1], [], []>} : vector<8x512xbf16>, vector<512x128xbf16>, vector<8x128xf32> -> vector<8x128xf32>
    %c0_53 = arith.constant 0 : index
    %c768_54 = arith.constant 768 : index
    %68 = vector.load %arg7[%c0_53, %c768_54] : memref<1x896xf32, #tpu.memory_space<vmem>>, vector<1x128xf32>
    %69 = vector.broadcast %68 : vector<1x128xf32> to vector<8x128xf32>
    %70 = arith.addf %67, %69 : vector<8x128xf32>
    %71 = math.tanh %70 : vector<8x128xf32>
    %72 = vector.extract_strided_slice %71 {offsets = [0, 0], sizes = [8, 16], strides = [1, 1]} : vector<8x128xf32> to vector<8x16xf32>
    %c0_55 = arith.constant 0 : index
    %c768_56 = arith.constant 768 : index
    %73 = vector.load %arg8[%c0_55, %c768_56] : memref<8x784xf32, #tpu.memory_space<vmem>>, vector<8x16xf32>
    tpu.vector_store %arg8[%c0_55, %c768_56], %72 {strides = array<i32>} : memref<8x784xf32, #tpu.memory_space<vmem>>, vector<8x16xf32>,
    return
  }
  func.func @transform_0(%arg0: i32) -> (i32, i32) {
    %c0_i32 = arith.constant 0 : i32
    %c0_i32_0 = arith.constant 0 : i32
    return %arg0, %c0_i32 : i32, i32
  }
  func.func @transform_1(%arg0: i32) -> (i32, i32) {
    %c0_i32 = arith.constant 0 : i32
    %c0_i32_0 = arith.constant 0 : i32
    %c0_i32_1 = arith.constant 0 : i32
    return %c0_i32, %c0_i32_0 : i32, i32
  }
  func.func @transform_2(%arg0: i32) -> (i32, i32) {
    %c0_i32 = arith.constant 0 : i32
    %c0_i32_0 = arith.constant 0 : i32
    %c0_i32_1 = arith.constant 0 : i32
    return %c0_i32, %c0_i32_0 : i32, i32
  }
  func.func @transform_3(%arg0: i32) -> (i32, i32) {
    %c0_i32 = arith.constant 0 : i32
    %c0_i32_0 = arith.constant 0 : i32
    %c0_i32_1 = arith.constant 0 : i32
    return %c0_i32, %c0_i32_0 : i32, i32
  }
  func.func @transform_4(%arg0: i32) -> (i32, i32) {
    %c0_i32 = arith.constant 0 : i32
    %c0_i32_0 = arith.constant 0 : i32
    %c0_i32_1 = arith.constant 0 : i32
    return %c0_i32, %c0_i32_0 : i32, i32
  }
  func.func @transform_5(%arg0: i32) -> (i32, i32) {
    %c0_i32 = arith.constant 0 : i32
    %c0_i32_0 = arith.constant 0 : i32
    %c0_i32_1 = arith.constant 0 : i32
    return %c0_i32, %c0_i32_0 : i32, i32
  }
  func.func @transform_6(%arg0: i32) -> (i32, i32) {
    %c0_i32 = arith.constant 0 : i32
    %c0_i32_0 = arith.constant 0 : i32
    %c0_i32_1 = arith.constant 0 : i32
    return %c0_i32, %c0_i32_0 : i32, i32
  }
  func.func @transform_7(%arg0: i32) -> (i32, i32) {
    %c0_i32 = arith.constant 0 : i32
    %c0_i32_0 = arith.constant 0 : i32
    return %arg0, %c0_i32 : i32, i32
  }
}

</mosaic_0001>

<llo_original>
// kernel: generator_forward.1
$region0: #{generator_forward.1}
  #allocation0 [shape = 'u32[]', space=smem, size = 0x4, offset = 0x4, fixed_abs, tag = 'smem constant byte address 0x4 - core index']
  #allocation1 [shape = 'u32[144,128]{1,0:T(1,128)}', space=vmem, size = 0x12000, scoped, tag = 'internal scratch']
  %s0 = inlined_call_operand.hbm [shape: f32[8,128], index: 0, kind: input, shape index: {}]
  %s1 = inlined_call_operand.hbm [shape: bf16[128,256], index: 1, kind: input, shape index: {}]
  %s2 = inlined_call_operand.vmem [shape: f32[1,256], index: 2, kind: input, shape index: {}]
  %s3 = inlined_call_operand.hbm [shape: bf16[256,512], index: 3, kind: input, shape index: {}]
  %s4 = inlined_call_operand.hbm [shape: f32[1,512], index: 4, kind: input, shape index: {}]
  %s5 = inlined_call_operand.hbm [shape: bf16[512,896], index: 5, kind: input, shape index: {}]
  %s6 = inlined_call_operand.vmem [shape: f32[1,896], index: 6, kind: input, shape index: {}]
  %s7 = inlined_call_operand.hbm [shape: f32[8,784], index: 7, kind: output, shape index: {}]
  %s8 = sld [smem:[#allocation0]]
  $region58: #{generator_forward.1} parent=0
    _
  %s10 = ssub.s32 1, %s8
  %s11 = scalar_select 0, %s10, %s8
  $region1: #{generator_forward.1} parent=0
    #allocation2 [shape = 'u8[4096]{0}', space=vmem, size = 0x1000, scoped, tag = 'input window, operand 0, single buffered']
    #allocation3 [shape = 's32[1]{0}', space=sflag, size = 0x4, scoped, tag = 'scoped memory for generator_forward.1']
    #allocation4 [shape = 's32[1]{0}', space=sflag, size = 0x4, scoped, tag = 'scoped memory for generator_forward.1']
    #allocation5 [shape = 'u8[65536]{0}', space=vmem, size = 0x10000, scoped, tag = 'input window, operand 1, single buffered']
    #allocation6 [shape = 's32[1]{0}', space=sflag, size = 0x4, scoped, tag = 'scoped memory for generator_forward.1']
    #allocation7 [shape = 'u8[262144]{0}', space=vmem, size = 0x40000, scoped, tag = 'input window, operand 3, single buffered']
    #allocation8 [shape = 'u8[2048]{0}', space=vmem, size = 0x800, scoped, tag = 'input window, operand 4, single buffered']
    #allocation9 [shape = 's32[1]{0}', space=sflag, size = 0x4, scoped, tag = 'scoped memory for generator_forward.1']
    #allocation10 [shape = 'u8[917504]{0}', space=vmem, size = 0xe0000, scoped, tag = 'input window, operand 5, single buffered']
    #allocation11 [shape = 'u8[28672]{0}', space=vmem, size = 0x7000, scoped, tag = 'output window, operand 0, single buffered']
    %12 = vsyncpa [#allocation3], 0
    %13 = vsyncpa [#allocation6], 0
    %14 = vsyncpa [#allocation9], 0
    %15 = vsyncpa [#allocation4], 0
    // Predicated region
    $region2: #{generator_forward.1} parent=1 // pred_check
      _
    $region3: #{generator_forward.1} parent=1 // pred_check_branch
      %17 = sbr.rel (0) target = $region5
    $region4: #{generator_forward.1} parent=1 // pred_region
      %s19 = ssub.s32 128, 128
      %20 = vsyncadd [#allocation3], %s19
      %s22 = sshll.u32 [#allocation2], 4
      %s23 = int_to_ptr.vmem [resolvable:$true] %s22
      %25 = dma.hbm_to_vmem [thread:$0]  %s0, 128, %s23, [#allocation3]
    $region5: #{generator_forward.1} parent=1 // pred_fallthru
      _
    // Predicated region
    $region6: #{generator_forward.1} parent=1 // pred_check
      _
    $region7: #{generator_forward.1} parent=1 // pred_check_branch
      %27 = sbr.rel (0) target = $region9
    $region8: #{generator_forward.1} parent=1 // pred_region
      %s29 = ssub.s32 2048, 2048
      %30 = vsyncadd [#allocation6], %s29
      %s31 = sshll.u32 [#allocation5], 4
      %s32 = int_to_ptr.vmem [resolvable:$true] %s31
      %37 = dma.hbm_to_vmem [thread:$0]  %s1, 2048, %s32, [#allocation6], 128, 128, 8
    $region9: #{generator_forward.1} parent=1 // pred_fallthru
      _
    // Predicated region
    $region10: #{generator_forward.1} parent=1 // pred_check
      _
    $region11: #{generator_forward.1} parent=1 // pred_check_branch
      %39 = sbr.rel (0) target = $region13
    $region12: #{generator_forward.1} parent=1 // pred_region
      _
    $region13: #{generator_forward.1} parent=1 // pred_fallthru
      _
    // Predicated region
    $region14: #{generator_forward.1} parent=1 // pred_check
      _
    $region15: #{generator_forward.1} parent=1 // pred_check_branch
      %41 = sbr.rel (0) target = $region17
    $region16: #{generator_forward.1} parent=1 // pred_region
      %s43 = ssub.s32 8192, 8192
      %44 = vsyncadd [#allocation6], %s43
      %s45 = sshll.u32 [#allocation7], 4
      %s46 = int_to_ptr.vmem [resolvable:$true] %s45
      %51 = dma.hbm_to_vmem [thread:$0]  %s3, 8192, %s46, [#allocation6], 256, 256, 16
    $region17: #{generator_forward.1} parent=1 // pred_fallthru
      _
    // Predicated region
    $region18: #{generator_forward.1} parent=1 // pred_check
      _
    $region19: #{generator_forward.1} parent=1 // pred_check_branch
      %53 = sbr.rel (0) target = $region21
    $region20: #{generator_forward.1} parent=1 // pred_region
      %s55 = ssub.s32 64, 64
      %56 = vsyncadd [#allocation9], %s55
      %s58 = sshll.u32 [#allocation8], 4
      %s59 = int_to_ptr.vmem [resolvable:$true] %s58
      %61 = dma.hbm_to_vmem [thread:$0]  %s4, 64, %s59, [#allocation9]
    $region21: #{generator_forward.1} parent=1 // pred_fallthru
      _
    // Predicated region
    $region22: #{generator_forward.1} parent=1 // pred_check
      _
    $region23: #{generator_forward.1} parent=1 // pred_check_branch
      %63 = sbr.rel (0) target = $region25
    $region24: #{generator_forward.1} parent=1 // pred_region
      %s65 = ssub.s32 28672, 28672
      %66 = vsyncadd [#allocation9], %s65
      %s67 = sshll.u32 [#allocation10], 4
      %s68 = int_to_ptr.vmem [resolvable:$true] %s67
      %73 = dma.hbm_to_vmem [thread:$0]  %s5, 28672, %s68, [#allocation9], 448, 448, 28
    $region25: #{generator_forward.1} parent=1 // pred_fallthru
      _
    // Predicated region
    $region26: #{generator_forward.1} parent=1 // pred_check
      _
    $region27: #{generator_forward.1} parent=1 // pred_check_branch
      %75 = sbr.rel (0) target = $region29
    $region28: #{generator_forward.1} parent=1 // pred_region
      _
    $region29: #{generator_forward.1} parent=1 // pred_fallthru
      _
    // Predicated region
    $region30: #{generator_forward.1} parent=1 // pred_check
      _
    $region31: #{generator_forward.1} parent=1 // pred_check_branch
      %77 = sbr.rel (0) target = $region33
    $region32: #{generator_forward.1} parent=1 // pred_region
      %78 = dma.done [#allocation3], 128
    $region33: #{generator_forward.1} parent=1 // pred_fallthru
      _
    // Predicated region
    $region34: #{generator_forward.1} parent=1 // pred_check
      _
    $region35: #{generator_forward.1} parent=1 // pred_check_branch
      %80 = sbr.rel (0) target = $region37
    $region36: #{generator_forward.1} parent=1 // pred_region
      %81 = dma.done [#allocation6], 2048
    $region37: #{generator_forward.1} parent=1 // pred_fallthru
      _
    // Predicated region
    $region38: #{generator_forward.1} parent=1 // pred_check
      _
    $region39: #{generator_forward.1} parent=1 // pred_check_branch
      %83 = sbr.rel (0) target = $region41
    $region40: #{generator_forward.1} parent=1 // pred_region
      %84 = dma.done [#allocation6], 8192
    $region41: #{generator_forward.1} parent=1 // pred_fallthru
      _
    // Predicated region
    $region42: #{generator_forward.1} parent=1 // pred_check
      _
    $region43: #{generator_forward.1} parent=1 // pred_check_branch
      %86 = sbr.rel (0) target = $region45
    $region44: #{generator_forward.1} parent=1 // pred_region
      %87 = dma.done [#allocation9], 64
    $region45: #{generator_forward.1} parent=1 // pred_fallthru
      _
    // Predicated region
    $region46: #{generator_forward.1} parent=1 // pred_check
      _
    $region47: #{generator_forward.1} parent=1 // pred_check_branch
      %89 = sbr.rel (0) target = $region49
    $region48: #{generator_forward.1} parent=1 // pred_region
      %90 = dma.done [#allocation9], 28672
    $region49: #{generator_forward.1} parent=1 // pred_fallthru
      _
    %v92 = vld [vmem:[#allocation2] sm:$0xff]
    %v93 = vpack.c.bf16 %v92, %v92
    %v94 = vld [vmem:[#allocation5] sm:$0xff]
    %v95 = vld [vmem:[#allocation5 + $0x8] sm:$0xff]
    %v96 = vld [vmem:[#allocation5 + $0x10] sm:$0xff]
    %v97 = vld [vmem:[#allocation5 + $0x18] sm:$0xff]
    %v98 = vld [vmem:[#allocation5 + $0x20] sm:$0xff]
    %v99 = vld [vmem:[#allocation5 + $0x28] sm:$0xff]
    %v100 = vld [vmem:[#allocation5 + $0x30] sm:$0xff]
    %v101 = vld [vmem:[#allocation5 + $0x38] sm:$0xff]
    %v102 = vld [vmem:[#allocation5 + $0x40] sm:$0xff]
    %v103 = vld [vmem:[#allocation5 + $0x48] sm:$0xff]
    %v104 = vld [vmem:[#allocation5 + $0x50] sm:$0xff]
    %v105 = vld [vmem:[#allocation5 + $0x58] sm:$0xff]
    %v106 = vld [vmem:[#allocation5 + $0x60] sm:$0xff]
    %v107 = vld [vmem:[#allocation5 + $0x68] sm:$0xff]
    %v108 = vld [vmem:[#allocation5 + $0x70] sm:$0xff]
    %v109 = vld [vmem:[#allocation5 + $0x78] sm:$0xff]
    %v110 = vld [vmem:[%s2] sm:$0x3]
    %v112 = vlaneseq
    %v113 = vshrl.u32 %v112, 7
    %v114 = vsub.s32 0, %v113
    %v115 = vrot.slane %v110, %v114
    %v116 = vlaneseq
    %v117 = vshrl.u32 %v116, 7
    %v118 = vsub.s32 1, %v117
    %v119 = vrot.slane %v110, %v118
    %v138 = vunpack.c.l.b16 %v94
    %v139 = vunpack.c.h.b16 %v94
    %v140 = vunpack.c.l.b16 %v95
    %v141 = vunpack.c.h.b16 %v95
    %v142 = vunpack.c.l.b16 %v96
    %v143 = vunpack.c.h.b16 %v96
    %v144 = vunpack.c.l.b16 %v97
    %v145 = vunpack.c.h.b16 %v97
    %v146 = vunpack.c.l.b16 %v98
    %v147 = vunpack.c.h.b16 %v98
    %v148 = vunpack.c.l.b16 %v99
    %v149 = vunpack.c.h.b16 %v99
    %v150 = vunpack.c.l.b16 %v100
    %v151 = vunpack.c.h.b16 %v100
    %v152 = vunpack.c.l.b16 %v101
    %v153 = vunpack.c.h.b16 %v101
    %v154 = vunpack.c.l.b16 %v102
    %v155 = vunpack.c.h.b16 %v102
    %v156 = vunpack.c.l.b16 %v103
    %v157 = vunpack.c.h.b16 %v103
    %v158 = vunpack.c.l.b16 %v104
    %v159 = vunpack.c.h.b16 %v104
    %v160 = vunpack.c.l.b16 %v105
    %v161 = vunpack.c.h.b16 %v105
    %v162 = vunpack.c.l.b16 %v106
    %v163 = vunpack.c.h.b16 %v106
    %v164 = vunpack.c.l.b16 %v107
    %v165 = vunpack.c.h.b16 %v107
    %v166 = vunpack.c.l.b16 %v108
    %v167 = vunpack.c.h.b16 %v108
    %v168 = vunpack.c.l.b16 %v109
    %v169 = vunpack.c.h.b16 %v109
    %v170 = vpack.c.b16 %v140, %v138
    %v171 = vpack.c.b16 %v141, %v139
    %v172 = vpack.c.b16 %v144, %v142
    %v173 = vpack.c.b16 %v145, %v143
    %v174 = vpack.c.b16 %v148, %v146
    %v175 = vpack.c.b16 %v149, %v147
    %v176 = vpack.c.b16 %v152, %v150
    %v177 = vpack.c.b16 %v153, %v151
    %v178 = vpack.c.b16 %v156, %v154
    %v179 = vpack.c.b16 %v157, %v155
    %v180 = vpack.c.b16 %v160, %v158
    %v181 = vpack.c.b16 %v161, %v159
    %v182 = vpack.c.b16 %v164, %v162
    %v183 = vpack.c.b16 %v165, %v163
    %v184 = vpack.c.b16 %v168, %v166
    %v185 = vpack.c.b16 %v169, %v167
    %202 = vmatprep.subr.bf16.mxu0 %v185
    %203 = vmatpush1.bf16.msra.mxu0 %v184
    %204 = vmatprep.subr.bf16.mxu0 %v183
    %205 = vmatpush1.bf16.msra.mxu0 %v182
    %206 = vmatprep.subr.bf16.mxu0 %v181
    %207 = vmatpush1.bf16.msra.mxu0 %v180
    %208 = vmatprep.subr.bf16.mxu0 %v179
    %209 = vmatpush1.bf16.msra.mxu0 %v178
    %210 = vmatprep.subr.bf16.mxu0 %v177
    %211 = vmatpush1.bf16.msra.mxu0 %v176
    %212 = vmatprep.subr.bf16.mxu0 %v175
    %213 = vmatpush1.bf16.msra.mxu0 %v174
    %214 = vmatprep.subr.bf16.mxu0 %v173
    %215 = vmatpush1.bf16.msra.mxu0 %v172
    %216 = vmatprep.subr.bf16.mxu0 %v171
    %217 = vmatpush1.bf16.msra.mxu0 %v170
    %218 = vmatprep.subr.bf16.mxu0 0
    %219 = vmatpush2.bf16.msra.mxu0 0
    %220 = vmatprep.subr.bf16.mxu0 0
    %221 = vmatpush2.bf16.msra.mxu0 0
    %222 = vmatprep.subr.bf16.mxu0 0
    %223 = vmatpush2.bf16.msra.mxu0 0
    %224 = vmatprep.subr.bf16.mxu0 0
    %225 = vmatpush2.bf16.msra.mxu0 0
    %226 = vmatprep.subr.bf16.mxu0 0
    %227 = vmatpush2.bf16.msra.mxu0 0
    %228 = vmatprep.subr.bf16.mxu0 0
    %229 = vmatpush2.bf16.msra.mxu0 0
    %230 = vmatprep.subr.bf16.mxu0 0
    %231 = vmatpush2.bf16.msra.mxu0 0
    %232 = vmatprep.subr.bf16.mxu0 0
    %233 = vmatpush2.bf16.msra.mxu0 0
    %234 = vmatprep.mubr.bf16.mxu0 0
    %235 = vmatmul.mubr.bf16.gmra.mxu0 %v93
    %v236 = vpop.f32.mrf.mxu0
    %v237 = vadd.f32 %v115, %v236
    %v238 = vpop.f32.mrf.mxu0
    %v239 = vadd.f32 %v119, %v238
    %v240 = vpop.f32.mrf.mxu0
    %v241 = vpop.f32.mrf.mxu0
    %242 = vdwg.mxu0
    %vm243 = vcmp.gt.f32.partialorder %v237, 0.0
    %vm244 = vcmp.gt.f32.partialorder %v239, 0.0
    %v245 = vmul.f32 %v237, 0.2
    %v246 = vmul.f32 %v239, 0.2
    %v247 = vsel %vm243, %v237, %v245
    %v248 = vsel %vm244, %v239, %v246
    %v249 = vpack.c.bf16 %v247, %v247
    %v250 = vpack.c.bf16 %v248, %v248
    %v251 = vld [vmem:[#allocation7] sm:$0xff]
    %v252 = vld [vmem:[#allocation7 + $0x8] sm:$0xff]
    %v253 = vld [vmem:[#allocation7 + $0x10] sm:$0xff]
    %v254 = vld [vmem:[#allocation7 + $0x18] sm:$0xff]
    %v255 = vld [vmem:[#allocation7 + $0x20] sm:$0xff]
    %v256 = vld [vmem:[#allocation7 + $0x28] sm:$0xff]
    %v257 = vld [vmem:[#allocation7 + $0x30] sm:$0xff]
    %v258 = vld [vmem:[#allocation7 + $0x38] sm:$0xff]
    %v259 = vld [vmem:[#allocation7 + $0x40] sm:$0xff]
    %v260 = vld [vmem:[#allocation7 + $0x48] sm:$0xff]
    %v261 = vld [vmem:[#allocation7 + $0x50] sm:$0xff]
    %v262 = vld [vmem:[#allocation7 + $0x58] sm:$0xff]
    %v263 = vld [vmem:[#allocation7 + $0x60] sm:$0xff]
    %v264 = vld [vmem:[#allocation7 + $0x68] sm:$0xff]
    %v265 = vld [vmem:[#allocation7 + $0x70] sm:$0xff]
    %v266 = vld [vmem:[#allocation7 + $0x78] sm:$0xff]
    %v267 = vld [vmem:[#allocation7 + $0x80] sm:$0xff]
    %v268 = vld [vmem:[#allocation7 + $0x88] sm:$0xff]
    %v269 = vld [vmem:[#allocation7 + $0x90] sm:$0xff]
    %v270 = vld [vmem:[#allocation7 + $0x98] sm:$0xff]
    %v271 = vld [vmem:[#allocation7 + $0xa0] sm:$0xff]
    %v272 = vld [vmem:[#allocation7 + $0xa8] sm:$0xff]
    %v273 = vld [vmem:[#allocation7 + $0xb0] sm:$0xff]
    %v274 = vld [vmem:[#allocation7 + $0xb8] sm:$0xff]
    %v275 = vld [vmem:[#allocation7 + $0xc0] sm:$0xff]
    %v276 = vld [vmem:[#allocation7 + $0xc8] sm:$0xff]
    %v277 = vld [vmem:[#allocation7 + $0xd0] sm:$0xff]
    %v278 = vld [vmem:[#allocation7 + $0xd8] sm:$0xff]
    %v279 = vld [vmem:[#allocation7 + $0xe0] sm:$0xff]
    %v280 = vld [vmem:[#allocation7 + $0xe8] sm:$0xff]
    %v281 = vld [vmem:[#allocation7 + $0xf0] sm:$0xff]
    %v282 = vld [vmem:[#allocation7 + $0xf8] sm:$0xff]
    %v283 = vld [vmem:[#allocation7 + $0x100] sm:$0xff]
    %v284 = vld [vmem:[#allocation7 + $0x108] sm:$0xff]
    %v285 = vld [vmem:[#allocation7 + $0x110] sm:$0xff]
    %v286 = vld [vmem:[#allocation7 + $0x118] sm:$0xff]
    %v287 = vld [vmem:[#allocation7 + $0x120] sm:$0xff]
    %v288 = vld [vmem:[#allocation7 + $0x128] sm:$0xff]
    %v289 = vld [vmem:[#allocation7 + $0x130] sm:$0xff]
    %v290 = vld [vmem:[#allocation7 + $0x138] sm:$0xff]
    %v291 = vld [vmem:[#allocation7 + $0x140] sm:$0xff]
    %v292 = vld [vmem:[#allocation7 + $0x148] sm:$0xff]
    %v293 = vld [vmem:[#allocation7 + $0x150] sm:$0xff]
    %v294 = vld [vmem:[#allocation7 + $0x158] sm:$0xff]
    %v295 = vld [vmem:[#allocation7 + $0x160] sm:$0xff]
    %v296 = vld [vmem:[#allocation7 + $0x168] sm:$0xff]
    %v297 = vld [vmem:[#allocation7 + $0x170] sm:$0xff]
    %v298 = vld [vmem:[#allocation7 + $0x178] sm:$0xff]
    %v299 = vld [vmem:[#allocation7 + $0x180] sm:$0xff]
    %v300 = vld [vmem:[#allocation7 + $0x188] sm:$0xff]
    %v301 = vld [vmem:[#allocation7 + $0x190] sm:$0xff]
    %v302 = vld [vmem:[#allocation7 + $0x198] sm:$0xff]
    %v303 = vld [vmem:[#allocation7 + $0x1a0] sm:$0xff]
    %v304 = vld [vmem:[#allocation7 + $0x1a8] sm:$0xff]
    %v305 = vld [vmem:[#allocation7 + $0x1b0] sm:$0xff]
    %v306 = vld [vmem:[#allocation7 + $0x1b8] sm:$0xff]
    %v307 = vld [vmem:[#allocation7 + $0x1c0] sm:$0xff]
    %v308 = vld [vmem:[#allocation7 + $0x1c8] sm:$0xff]
    %v309 = vld [vmem:[#allocation7 + $0x1d0] sm:$0xff]
    %v310 = vld [vmem:[#allocation7 + $0x1d8] sm:$0xff]
    %v311 = vld [vmem:[#allocation7 + $0x1e0] sm:$0xff]
    %v312 = vld [vmem:[#allocation7 + $0x1e8] sm:$0xff]
    %v313 = vld [vmem:[#allocation7 + $0x1f0] sm:$0xff]
    %v314 = vld [vmem:[#allocation7 + $0x1f8] sm:$0xff]
    %v315 = vld [vmem:[#allocation8] sm:$0xf]
    %v317 = vlaneseq
    %v318 = vshrl.u32 %v317, 7
    %v319 = vsub.s32 0, %v318
    %v320 = vrot.slane %v315, %v319
    %v321 = vlaneseq
    %v322 = vshrl.u32 %v321, 7
    %v323 = vsub.s32 1, %v322
    %v324 = vrot.slane %v315, %v323
    %v325 = vlaneseq
    %v326 = vshrl.u32 %v325, 7
    %v327 = vsub.s32 2, %v326
    %v328 = vrot.slane %v315, %v327
    %v329 = vlaneseq
    %v330 = vshrl.u32 %v329, 7
    %v331 = vsub.s32 3, %v330
    %v332 = vrot.slane %v315, %v331
    %v401 = vunpack.c.l.b16 %v251
    %v402 = vunpack.c.h.b16 %v251
    %v403 = vunpack.c.l.b16 %v252
    %v404 = vunpack.c.h.b16 %v252
    %v405 = vunpack.c.l.b16 %v253
    %v406 = vunpack.c.h.b16 %v253
    %v407 = vunpack.c.l.b16 %v254
    %v408 = vunpack.c.h.b16 %v254
    %v409 = vunpack.c.l.b16 %v255
    %v410 = vunpack.c.h.b16 %v255
    %v411 = vunpack.c.l.b16 %v256
    %v412 = vunpack.c.h.b16 %v256
    %v413 = vunpack.c.l.b16 %v257
    %v414 = vunpack.c.h.b16 %v257
    %v415 = vunpack.c.l.b16 %v258
    %v416 = vunpack.c.h.b16 %v258
    %v417 = vunpack.c.l.b16 %v259
    %v418 = vunpack.c.h.b16 %v259
    %v419 = vunpack.c.l.b16 %v260
    %v420 = vunpack.c.h.b16 %v260
    %v421 = vunpack.c.l.b16 %v261
    %v422 = vunpack.c.h.b16 %v261
    %v423 = vunpack.c.l.b16 %v262
    %v424 = vunpack.c.h.b16 %v262
    %v425 = vunpack.c.l.b16 %v263
    %v426 = vunpack.c.h.b16 %v263
    %v427 = vunpack.c.l.b16 %v264
    %v428 = vunpack.c.h.b16 %v264
    %v429 = vunpack.c.l.b16 %v265
    %v430 = vunpack.c.h.b16 %v265
    %v431 = vunpack.c.l.b16 %v266
    %v432 = vunpack.c.h.b16 %v266
    %v433 = vunpack.c.l.b16 %v267
    %v434 = vunpack.c.h.b16 %v267
    %v435 = vunpack.c.l.b16 %v268
    %v436 = vunpack.c.h.b16 %v268
    %v437 = vunpack.c.l.b16 %v269
    %v438 = vunpack.c.h.b16 %v269
    %v439 = vunpack.c.l.b16 %v270
    %v440 = vunpack.c.h.b16 %v270
    %v441 = vunpack.c.l.b16 %v271
    %v442 = vunpack.c.h.b16 %v271
    %v443 = vunpack.c.l.b16 %v272
    %v444 = vunpack.c.h.b16 %v272
    %v445 = vunpack.c.l.b16 %v273
    %v446 = vunpack.c.h.b16 %v273
    %v447 = vunpack.c.l.b16 %v274
    %v448 = vunpack.c.h.b16 %v274
    %v449 = vunpack.c.l.b16 %v275
    %v450 = vunpack.c.h.b16 %v275
    %v451 = vunpack.c.l.b16 %v276
    %v452 = vunpack.c.h.b16 %v276
    %v453 = vunpack.c.l.b16 %v277
    %v454 = vunpack.c.h.b16 %v277
    %v455 = vunpack.c.l.b16 %v278
    %v456 = vunpack.c.h.b16 %v278
    %v457 = vunpack.c.l.b16 %v279
    %v458 = vunpack.c.h.b16 %v279
    %v459 = vunpack.c.l.b16 %v280
    %v460 = vunpack.c.h.b16 %v280
    %v461 = vunpack.c.l.b16 %v281
    %v462 = vunpack.c.h.b16 %v281
    %v463 = vunpack.c.l.b16 %v282
    %v464 = vunpack.c.h.b16 %v282
    %v465 = vunpack.c.l.b16 %v283
    %v466 = vunpack.c.h.b16 %v283
    %v467 = vunpack.c.l.b16 %v284
    %v468 = vunpack.c.h.b16 %v284
    %v469 = vunpack.c.l.b16 %v285
    %v470 = vunpack.c.h.b16 %v285
    %v471 = vunpack.c.l.b16 %v286
    %v472 = vunpack.c.h.b16 %v286
    %v473 = vunpack.c.l.b16 %v287
    %v474 = vunpack.c.h.b16 %v287
    %v475 = vunpack.c.l.b16 %v288
    %v476 = vunpack.c.h.b16 %v288
    %v477 = vunpack.c.l.b16 %v289
    %v478 = vunpack.c.h.b16 %v289
    %v479 = vunpack.c.l.b16 %v290
    %v480 = vunpack.c.h.b16 %v290
    %v481 = vunpack.c.l.b16 %v291
    %v482 = vunpack.c.h.b16 %v291
    %v483 = vunpack.c.l.b16 %v292
    %v484 = vunpack.c.h.b16 %v292
    %v485 = vunpack.c.l.b16 %v293
    %v486 = vunpack.c.h.b16 %v293
    %v487 = vunpack.c.l.b16 %v294
    %v488 = vunpack.c.h.b16 %v294
    %v489 = vunpack.c.l.b16 %v295
    %v490 = vunpack.c.h.b16 %v295
    %v491 = vunpack.c.l.b16 %v296
    %v492 = vunpack.c.h.b16 %v296
    %v493 = vunpack.c.l.b16 %v297
    %v494 = vunpack.c.h.b16 %v297
    %v495 = vunpack.c.l.b16 %v298
    %v496 = vunpack.c.h.b16 %v298
    %v497 = vunpack.c.l.b16 %v299
    %v498 = vunpack.c.h.b16 %v299
    %v499 = vunpack.c.l.b16 %v300
    %v500 = vunpack.c.h.b16 %v300
    %v501 = vunpack.c.l.b16 %v301
    %v502 = vunpack.c.h.b16 %v301
    %v503 = vunpack.c.l.b16 %v302
    %v504 = vunpack.c.h.b16 %v302
    %v505 = vunpack.c.l.b16 %v303
    %v506 = vunpack.c.h.b16 %v303
    %v507 = vunpack.c.l.b16 %v304
    %v508 = vunpack.c.h.b16 %v304
    %v509 = vunpack.c.l.b16 %v305
    %v510 = vunpack.c.h.b16 %v305
    %v511 = vunpack.c.l.b16 %v306
    %v512 = vunpack.c.h.b16 %v306
    %v513 = vunpack.c.l.b16 %v307
    %v514 = vunpack.c.h.b16 %v307
    %v515 = vunpack.c.l.b16 %v308
    %v516 = vunpack.c.h.b16 %v308
    %v517 = vunpack.c.l.b16 %v309
    %v518 = vunpack.c.h.b16 %v309
    %v519 = vunpack.c.l.b16 %v310
    %v520 = vunpack.c.h.b16 %v310
    %v521 = vunpack.c.l.b16 %v311
    %v522 = vunpack.c.h.b16 %v311
    %v523 = vunpack.c.l.b16 %v312
    %v524 = vunpack.c.h.b16 %v312
    %v525 = vunpack.c.l.b16 %v313
    %v526 = vunpack.c.h.b16 %v313
    %v527 = vunpack.c.l.b16 %v314
    %v528 = vunpack.c.h.b16 %v314
    %v529 = vpack.c.b16 %v405, %v401
    %v530 = vpack.c.b16 %v406, %v402
    %v531 = vpack.c.b16 %v407, %v403
    %v532 = vpack.c.b16 %v408, %v404
    %v533 = vpack.c.b16 %v413, %v409
    %v534 = vpack.c.b16 %v414, %v410
    %v535 = vpack.c.b16 %v415, %v411
    %v536 = vpack.c.b16 %v416, %v412
    %v537 = vpack.c.b16 %v421, %v417
    %v538 = vpack.c.b16 %v422, %v418
    %v539 = vpack.c.b16 %v423, %v419
    %v540 = vpack.c.b16 %v424, %v420
    %v541 = vpack.c.b16 %v429, %v425
    %v542 = vpack.c.b16 %v430, %v426
    %v543 = vpack.c.b16 %v431, %v427
    %v544 = vpack.c.b16 %v432, %v428
    %v545 = vpack.c.b16 %v437, %v433
    %v546 = vpack.c.b16 %v438, %v434
    %v547 = vpack.c.b16 %v439, %v435
    %v548 = vpack.c.b16 %v440, %v436
    %v549 = vpack.c.b16 %v445, %v441
    %v550 = vpack.c.b16 %v446, %v442
    %v551 = vpack.c.b16 %v447, %v443
    %v552 = vpack.c.b16 %v448, %v444
    %v553 = vpack.c.b16 %v453, %v449
    %v554 = vpack.c.b16 %v454, %v450
    %v555 = vpack.c.b16 %v455, %v451
    %v556 = vpack.c.b16 %v456, %v452
    %v557 = vpack.c.b16 %v461, %v457
    %v558 = vpack.c.b16 %v462, %v458
    %v559 = vpack.c.b16 %v463, %v459
    %v560 = vpack.c.b16 %v464, %v460
    %v561 = vpack.c.b16 %v469, %v465
    %v562 = vpack.c.b16 %v470, %v466
    %v563 = vpack.c.b16 %v471, %v467
    %v564 = vpack.c.b16 %v472, %v468
    %v565 = vpack.c.b16 %v477, %v473
    %v566 = vpack.c.b16 %v478, %v474
    %v567 = vpack.c.b16 %v479, %v475
    %v568 = vpack.c.b16 %v480, %v476
    %v569 = vpack.c.b16 %v485, %v481
    %v570 = vpack.c.b16 %v486, %v482
    %v571 = vpack.c.b16 %v487, %v483
    %v572 = vpack.c.b16 %v488, %v484
    %v573 = vpack.c.b16 %v493, %v489
    %v574 = vpack.c.b16 %v494, %v490
    %v575 = vpack.c.b16 %v495, %v491
    %v576 = vpack.c.b16 %v496, %v492
    %v577 = vpack.c.b16 %v501, %v497
    %v578 = vpack.c.b16 %v502, %v498
    %v579 = vpack.c.b16 %v503, %v499
    %v580 = vpack.c.b16 %v504, %v500
    %v581 = vpack.c.b16 %v509, %v505
    %v582 = vpack.c.b16 %v510, %v506
    %v583 = vpack.c.b16 %v511, %v507
    %v584 = vpack.c.b16 %v512, %v508
    %v585 = vpack.c.b16 %v517, %v513
    %v586 = vpack.c.b16 %v518, %v514
    %v587 = vpack.c.b16 %v519, %v515
    %v588 = vpack.c.b16 %v520, %v516
    %v589 = vpack.c.b16 %v525, %v521
    %v590 = vpack.c.b16 %v526, %v522
    %v591 = vpack.c.b16 %v527, %v523
    %v592 = vpack.c.b16 %v528, %v524
    %657 = vmatprep.subr.bf16.mxu0 %v558
    %658 = vmatpush1.bf16.msra.mxu0 %v557
    %659 = vmatprep.subr.bf16.mxu0 %v554
    %660 = vmatpush1.bf16.msra.mxu0 %v553
    %661 = vmatprep.subr.bf16.mxu0 %v550
    %662 = vmatpush1.bf16.msra.mxu0 %v549
    %663 = vmatprep.subr.bf16.mxu0 %v546
    %664 = vmatpush1.bf16.msra.mxu0 %v545
    %665 = vmatprep.subr.bf16.mxu0 %v542
    %666 = vmatpush1.bf16.msra.mxu0 %v541
    %667 = vmatprep.subr.bf16.mxu0 %v538
    %668 = vmatpush1.bf16.msra.mxu0 %v537
    %669 = vmatprep.subr.bf16.mxu0 %v534
    %670 = vmatpush1.bf16.msra.mxu0 %v533
    %671 = vmatprep.subr.bf16.mxu0 %v530
    %672 = vmatpush1.bf16.msra.mxu0 %v529
    %673 = vmatprep.subr.bf16.mxu0 %v590
    %674 = vmatpush2.bf16.msra.mxu0 %v589
    %675 = vmatprep.subr.bf16.mxu0 %v586
    %676 = vmatpush2.bf16.msra.mxu0 %v585
    %677 = vmatprep.subr.bf16.mxu0 %v582
    %678 = vmatpush2.bf16.msra.mxu0 %v581
    %679 = vmatprep.subr.bf16.mxu0 %v578
    %680 = vmatpush2.bf16.msra.mxu0 %v577
    %681 = vmatprep.subr.bf16.mxu0 %v574
    %682 = vmatpush2.bf16.msra.mxu0 %v573
    %683 = vmatprep.subr.bf16.mxu0 %v570
    %684 = vmatpush2.bf16.msra.mxu0 %v569
    %685 = vmatprep.subr.bf16.mxu0 %v566
    %686 = vmatpush2.bf16.msra.mxu0 %v565
    %687 = vmatprep.subr.bf16.mxu0 %v562
    %688 = vmatpush2.bf16.msra.mxu0 %v561
    %689 = vmatprep.mubr.bf16.mxu0 %v250
    %690 = vmatmul.mubr.bf16.gmra.mxu0 %v249
    %v691 = vpop.f32.mrf.mxu0
    %v692 = vadd.f32 %v320, %v691
    %v693 = vpop.f32.mrf.mxu0
    %v694 = vadd.f32 %v324, %v693
    %v695 = vpop.f32.mrf.mxu0
    %v696 = vpop.f32.mrf.mxu0
    %697 = vdwg.mxu0
    %698 = vmatprep.subr.bf16.mxu0 %v560
    %699 = vmatpush1.bf16.msra.mxu0 %v559
    %700 = vmatprep.subr.bf16.mxu0 %v556
    %701 = vmatpush1.bf16.msra.mxu0 %v555
    %702 = vmatprep.subr.bf16.mxu0 %v552
    %703 = vmatpush1.bf16.msra.mxu0 %v551
    %704 = vmatprep.subr.bf16.mxu0 %v548
    %705 = vmatpush1.bf16.msra.mxu0 %v547
    %706 = vmatprep.subr.bf16.mxu0 %v544
    %707 = vmatpush1.bf16.msra.mxu0 %v543
    %708 = vmatprep.subr.bf16.mxu0 %v540
    %709 = vmatpush1.bf16.msra.mxu0 %v539
    %710 = vmatprep.subr.bf16.mxu0 %v536
    %711 = vmatpush1.bf16.msra.mxu0 %v535
    %712 = vmatprep.subr.bf16.mxu0 %v532
    %713 = vmatpush1.bf16.msra.mxu0 %v531
    %714 = vmatprep.subr.bf16.mxu0 %v592
    %715 = vmatpush2.bf16.msra.mxu0 %v591
    %716 = vmatprep.subr.bf16.mxu0 %v588
    %717 = vmatpush2.bf16.msra.mxu0 %v587
    %718 = vmatprep.subr.bf16.mxu0 %v584
    %719 = vmatpush2.bf16.msra.mxu0 %v583
    %720 = vmatprep.subr.bf16.mxu0 %v580
    %721 = vmatpush2.bf16.msra.mxu0 %v579
    %722 = vmatprep.subr.bf16.mxu0 %v576
    %723 = vmatpush2.bf16.msra.mxu0 %v575
    %724 = vmatprep.subr.bf16.mxu0 %v572
    %725 = vmatpush2.bf16.msra.mxu0 %v571
    %726 = vmatprep.subr.bf16.mxu0 %v568
    %727 = vmatpush2.bf16.msra.mxu0 %v567
    %728 = vmatprep.subr.bf16.mxu0 %v564
    %729 = vmatpush2.bf16.msra.mxu0 %v563
    %730 = vmatprep.mubr.bf16.mxu0 %v250
    %731 = vmatmul.mubr.bf16.gmra.mxu0 %v249
    %v732 = vpop.f32.mrf.mxu0
    %v733 = vadd.f32 %v328, %v732
    %v734 = vpop.f32.mrf.mxu0
    %v735 = vadd.f32 %v332, %v734
    %v736 = vpop.f32.mrf.mxu0
    %v737 = vpop.f32.mrf.mxu0
    %738 = vdwg.mxu0
    %vm739 = vcmp.gt.f32.partialorder %v692, 0.0
    %vm740 = vcmp.gt.f32.partialorder %v694, 0.0
    %vm741 = vcmp.gt.f32.partialorder %v733, 0.0
    %vm742 = vcmp.gt.f32.partialorder %v735, 0.0
    %v743 = vmul.f32 %v692, 0.2
    %v744 = vmul.f32 %v694, 0.2
    %v745 = vmul.f32 %v733, 0.2
    %v746 = vmul.f32 %v735, 0.2
    %v747 = vsel %vm739, %v692, %v743
    %v748 = vsel %vm740, %v694, %v744
    %v749 = vsel %vm741, %v733, %v745
    %v750 = vsel %vm742, %v735, %v746
    %v751 = vpack.c.bf16 %v747, %v747
    %v752 = vpack.c.bf16 %v748, %v748
    %v753 = vpack.c.bf16 %v749, %v749
    %v754 = vpack.c.bf16 %v750, %v750
    %v755 = vld [vmem:[#allocation10] sm:$0xf]
    %v756 = vld [vmem:[#allocation10 + $0x1c] sm:$0xf]
    %v757 = vld [vmem:[#allocation10 + $0x38] sm:$0xf]
    %v758 = vld [vmem:[#allocation10 + $0x54] sm:$0xf]
    %v759 = vld [vmem:[#allocation10 + $0x70] sm:$0xf]
    %v760 = vld [vmem:[#allocation10 + $0x8c] sm:$0xf]
    %v761 = vld [vmem:[#allocation10 + $0xa8] sm:$0xf]
    %v762 = vld [vmem:[#allocation10 + $0xc4] sm:$0xf]
    %v763 = vld [vmem:[#allocation10 + $0xe0] sm:$0xf]
    %v764 = vld [vmem:[#allocation10 + $0xfc] sm:$0xf]
    %v765 = vld [vmem:[#allocation10 + $0x118] sm:$0xf]
    %v766 = vld [vmem:[#allocation10 + $0x134] sm:$0xf]
    %v767 = vld [vmem:[#allocation10 + $0x150] sm:$0xf]
    %v768 = vld [vmem:[#allocation10 + $0x16c] sm:$0xf]
    %v769 = vld [vmem:[#allocation10 + $0x188] sm:$0xf]
    %v770 = vld [vmem:[#allocation10 + $0x1a4] sm:$0xf]
    %v771 = vld [vmem:[#allocation10 + $0x1c0] sm:$0xf]
    %v772 = vld [vmem:[#allocation10 + $0x1dc] sm:$0xf]
    %v773 = vld [vmem:[#allocation10 + $0x1f8] sm:$0xf]
    %v774 = vld [vmem:[#allocation10 + $0x214] sm:$0xf]
    %v775 = vld [vmem:[#allocation10 + $0x230] sm:$0xf]
    %v776 = vld [vmem:[#allocation10 + $0x24c] sm:$0xf]
    %v777 = vld [vmem:[#allocation10 + $0x268] sm:$0xf]
    %v778 = vld [vmem:[#allocation10 + $0x284] sm:$0xf]
    %v779 = vld [vmem:[#allocation10 + $0x2a0] sm:$0xf]
    %v780 = vld [vmem:[#allocation10 + $0x2bc] sm:$0xf]
    %v781 = vld [vmem:[#allocation10 + $0x2d8] sm:$0xf]
    %v782 = vld [vmem:[#allocation10 + $0x2f4] sm:$0xf]
    %v783 = vld [vmem:[#allocation10 + $0x310] sm:$0xf]
    %v784 = vld [vmem:[#allocation10 + $0x32c] sm:$0xf]
    %v785 = vld [vmem:[#allocation10 + $0x348] sm:$0xf]
    %v786 = vld [vmem:[#allocation10 + $0x364] sm:$0xf]
    %v787 = vld [vmem:[#allocation10 + $0x380] sm:$0xf]
    %v788 = vld [vmem:[#allocation10 + $0x39c] sm:$0xf]
    %v789 = vld [vmem:[#allocation10 + $0x3b8] sm:$0xf]
    %v790 = vld [vmem:[#allocation10 + $0x3d4] sm:$0xf]
    %v791 = vld [vmem:[#allocation10 + $0x3f0] sm:$0xf]
    %v792 = vld [vmem:[#allocation10 + $0x40c] sm:$0xf]
    %v793 = vld [vmem:[#allocation10 + $0x428] sm:$0xf]
    %v794 = vld [vmem:[#allocation10 + $0x444] sm:$0xf]
    %v795 = vld [vmem:[#allocation10 + $0x460] sm:$0xf]
    %v796 = vld [vmem:[#allocation10 + $0x47c] sm:$0xf]
    %v797 = vld [vmem:[#allocation10 + $0x498] sm:$0xf]
    %v798 = vld [vmem:[#allocation10 + $0x4b4] sm:$0xf]
    %v799 = vld [vmem:[#allocation10 + $0x4d0] sm:$0xf]
    %v800 = vld [vmem:[#allocation10 + $0x4ec] sm:$0xf]
    %v801 = vld [vmem:[#allocation10 + $0x508] sm:$0xf]
    %v802 = vld [vmem:[#allocation10 + $0x524] sm:$0xf]
    %v803 = vld [vmem:[#allocation10 + $0x540] sm:$0xf]
    %v804 = vld [vmem:[#allocation10 + $0x55c] sm:$0xf]
    %v805 = vld [vmem:[#allocation10 + $0x578] sm:$0xf]
    %v806 = vld [vmem:[#allocation10 + $0x594] sm:$0xf]
    %v807 = vld [vmem:[#allocation10 + $0x5b0] sm:$0xf]
    %v808 = vld [vmem:[#allocation10 + $0x5cc] sm:$0xf]
    %v809 = vld [vmem:[#allocation10 + $0x5e8] sm:$0xf]
    %v810 = vld [vmem:[#allocation10 + $0x604] sm:$0xf]
    %v811 = vld [vmem:[#allocation10 + $0x620] sm:$0xf]
    %v812 = vld [vmem:[#allocation10 + $0x63c] sm:$0xf]
    %v813 = vld [vmem:[#allocation10 + $0x658] sm:$0xf]
    %v814 = vld [vmem:[#allocation10 + $0x674] sm:$0xf]
    %v815 = vld [vmem:[#allocation10 + $0x690] sm:$0xf]
    %v816 = vld [vmem:[#allocation10 + $0x6ac] sm:$0xf]
    %v817 = vld [vmem:[#allocation10 + $0x6c8] sm:$0xf]
    %v818 = vld [vmem:[#allocation10 + $0x6e4] sm:$0xf]
    %v819 = vld [vmem:[%s6] sm:$0x1]
    %v821 = vlaneseq
    %v822 = vshrl.u32 %v821, 7
    %v823 = vsub.s32 0, %v822
    %v824 = vrot.slane %v819, %v823
    %v890 = vunpack.c.l.b16 %v755
    %v891 = vunpack.c.l.b16 %v756
    %v892 = vunpack.c.l.b16 %v757
    %v893 = vunpack.c.l.b16 %v758
    %v894 = vunpack.c.l.b16 %v759
    %v895 = vunpack.c.l.b16 %v760
    %v896 = vunpack.c.l.b16 %v761
    %v897 = vunpack.c.l.b16 %v762
    %v898 = vunpack.c.l.b16 %v763
    %v899 = vunpack.c.l.b16 %v764
    %v900 = vunpack.c.l.b16 %v765
    %v901 = vunpack.c.l.b16 %v766
    %v902 = vunpack.c.l.b16 %v767
    %v903 = vunpack.c.l.b16 %v768
    %v904 = vunpack.c.l.b16 %v769
    %v905 = vunpack.c.l.b16 %v770
    %v906 = vunpack.c.l.b16 %v771
    %v907 = vunpack.c.l.b16 %v772
    %v908 = vunpack.c.l.b16 %v773
    %v909 = vunpack.c.l.b16 %v774
    %v910 = vunpack.c.l.b16 %v775
    %v911 = vunpack.c.l.b16 %v776
    %v912 = vunpack.c.l.b16 %v777
    %v913 = vunpack.c.l.b16 %v778
    %v914 = vunpack.c.l.b16 %v779
    %v915 = vunpack.c.l.b16 %v780
    %v916 = vunpack.c.l.b16 %v781
    %v917 = vunpack.c.l.b16 %v782
    %v918 = vunpack.c.l.b16 %v783
    %v919 = vunpack.c.l.b16 %v784
    %v920 = vunpack.c.l.b16 %v785
    %v921 = vunpack.c.l.b16 %v786
    %v922 = vunpack.c.l.b16 %v787
    %v923 = vunpack.c.l.b16 %v788
    %v924 = vunpack.c.l.b16 %v789
    %v925 = vunpack.c.l.b16 %v790
    %v926 = vunpack.c.l.b16 %v791
    %v927 = vunpack.c.l.b16 %v792
    %v928 = vunpack.c.l.b16 %v793
    %v929 = vunpack.c.l.b16 %v794
    %v930 = vunpack.c.l.b16 %v795
    %v931 = vunpack.c.l.b16 %v796
    %v932 = vunpack.c.l.b16 %v797
    %v933 = vunpack.c.l.b16 %v798
    %v934 = vunpack.c.l.b16 %v799
    %v935 = vunpack.c.l.b16 %v800
    %v936 = vunpack.c.l.b16 %v801
    %v937 = vunpack.c.l.b16 %v802
    %v938 = vunpack.c.l.b16 %v803
    %v939 = vunpack.c.l.b16 %v804
    %v940 = vunpack.c.l.b16 %v805
    %v941 = vunpack.c.l.b16 %v806
    %v942 = vunpack.c.l.b16 %v807
    %v943 = vunpack.c.l.b16 %v808
    %v944 = vunpack.c.l.b16 %v809
    %v945 = vunpack.c.l.b16 %v810
    %v946 = vunpack.c.l.b16 %v811
    %v947 = vunpack.c.l.b16 %v812
    %v948 = vunpack.c.l.b16 %v813
    %v949 = vunpack.c.l.b16 %v814
    %v950 = vunpack.c.l.b16 %v815
    %v951 = vunpack.c.l.b16 %v816
    %v952 = vunpack.c.l.b16 %v817
    %v953 = vunpack.c.l.b16 %v818
    %v954 = vpack.c.b16 %v891, %v890
    %v955 = vpack.c.b16 %v893, %v892
    %v956 = vpack.c.b16 %v895, %v894
    %v957 = vpack.c.b16 %v897, %v896
    %v958 = vpack.c.b16 %v899, %v898
    %v959 = vpack.c.b16 %v901, %v900
    %v960 = vpack.c.b16 %v903, %v902
    %v961 = vpack.c.b16 %v905, %v904
    %v962 = vpack.c.b16 %v907, %v906
    %v963 = vpack.c.b16 %v909, %v908
    %v964 = vpack.c.b16 %v911, %v910
    %v965 = vpack.c.b16 %v913, %v912
    %v966 = vpack.c.b16 %v915, %v914
    %v967 = vpack.c.b16 %v917, %v916
    %v968 = vpack.c.b16 %v919, %v918
    %v969 = vpack.c.b16 %v921, %v920
    %v970 = vpack.c.b16 %v923, %v922
    %v971 = vpack.c.b16 %v925, %v924
    %v972 = vpack.c.b16 %v927, %v926
    %v973 = vpack.c.b16 %v929, %v928
    %v974 = vpack.c.b16 %v931, %v930
    %v975 = vpack.c.b16 %v933, %v932
    %v976 = vpack.c.b16 %v935, %v934
    %v977 = vpack.c.b16 %v937, %v936
    %v978 = vpack.c.b16 %v939, %v938
    %v979 = vpack.c.b16 %v941, %v940
    %v980 = vpack.c.b16 %v943, %v942
    %v981 = vpack.c.b16 %v945, %v944
    %v982 = vpack.c.b16 %v947, %v946
    %v983 = vpack.c.b16 %v949, %v948
    %v984 = vpack.c.b16 %v951, %v950
    %v985 = vpack.c.b16 %v953, %v952
    %1018 = vmatprep.subr.bf16.mxu0 0
    %1019 = vmatpush1.bf16.msra.mxu0 %v961
    %1020 = vmatprep.subr.bf16.mxu0 0
    %1021 = vmatpush1.bf16.msra.mxu0 %v960
    %1022 = vmatprep.subr.bf16.mxu0 0
    %1023 = vmatpush1.bf16.msra.mxu0 %v959
    %1024 = vmatprep.subr.bf16.mxu0 0
    %1025 = vmatpush1.bf16.msra.mxu0 %v958
    %1026 = vmatprep.subr.bf16.mxu0 0
    %1027 = vmatpush1.bf16.msra.mxu0 %v957
    %1028 = vmatprep.subr.bf16.mxu0 0
    %1029 = vmatpush1.bf16.msra.mxu0 %v956
    %1030 = vmatprep.subr.bf16.mxu0 0
    %1031 = vmatpush1.bf16.msra.mxu0 %v955
    %1032 = vmatprep.subr.bf16.mxu0 0
    %1033 = vmatpush1.bf16.msra.mxu0 %v954
    %1034 = vmatprep.subr.bf16.mxu0 0
    %1035 = vmatpush2.bf16.msra.mxu0 %v969
    %1036 = vmatprep.subr.bf16.mxu0 0
    %1037 = vmatpush2.bf16.msra.mxu0 %v968
    %1038 = vmatprep.subr.bf16.mxu0 0
    %1039 = vmatpush2.bf16.msra.mxu0 %v967
    %1040 = vmatprep.subr.bf16.mxu0 0
    %1041 = vmatpush2.bf16.msra.mxu0 %v966
    %1042 = vmatprep.subr.bf16.mxu0 0
    %1043 = vmatpush2.bf16.msra.mxu0 %v965
    %1044 = vmatprep.subr.bf16.mxu0 0
    %1045 = vmatpush2.bf16.msra.mxu0 %v964
    %1046 = vmatprep.subr.bf16.mxu0 0
    %1047 = vmatpush2.bf16.msra.mxu0 %v963
    %1048 = vmatprep.subr.bf16.mxu0 0
    %1049 = vmatpush2.bf16.msra.mxu0 %v962
    %1050 = vmatprep.mubr.bf16.mxu0 %v752
    %1051 = vmatmul.mubr.bf16.gmra.mxu0 %v751
    %v1052 = vpop.f32.mrf.mxu0
    %v1053 = vadd.f32 %v824, %v1052
    %v1054 = vpop.f32.mrf.mxu0
    %v1055 = vpop.f32.mrf.mxu0
    %v1056 = vpop.f32.mrf.mxu0
    %1057 = vdwg.mxu0
    %1058 = vmatprep.subr.bf16.mxu0 0
    %1059 = vmatpush1.bf16.msra.mxu0 %v977
    %1060 = vmatprep.subr.bf16.mxu0 0
    %1061 = vmatpush1.bf16.msra.mxu0 %v976
    %1062 = vmatprep.subr.bf16.mxu0 0
    %1063 = vmatpush1.bf16.msra.mxu0 %v975
    %1064 = vmatprep.subr.bf16.mxu0 0
    %1065 = vmatpush1.bf16.msra.mxu0 %v974
    %1066 = vmatprep.subr.bf16.mxu0 0
    %1067 = vmatpush1.bf16.msra.mxu0 %v973
    %1068 = vmatprep.subr.bf16.mxu0 0
    %1069 = vmatpush1.bf16.msra.mxu0 %v972
    %1070 = vmatprep.subr.bf16.mxu0 0
    %1071 = vmatpush1.bf16.msra.mxu0 %v971
    %1072 = vmatprep.subr.bf16.mxu0 0
    %1073 = vmatpush1.bf16.msra.mxu0 %v970
    %1074 = vmatprep.subr.bf16.mxu0 0
    %1075 = vmatpush2.bf16.msra.mxu0 %v985
    %1076 = vmatprep.subr.bf16.mxu0 0
    %1077 = vmatpush2.bf16.msra.mxu0 %v984
    %1078 = vmatprep.subr.bf16.mxu0 0
    %1079 = vmatpush2.bf16.msra.mxu0 %v983
    %1080 = vmatprep.subr.bf16.mxu0 0
    %1081 = vmatpush2.bf16.msra.mxu0 %v982
    %1082 = vmatprep.subr.bf16.mxu0 0
    %1083 = vmatpush2.bf16.msra.mxu0 %v981
    %1084 = vmatprep.subr.bf16.mxu0 0
    %1085 = vmatpush2.bf16.msra.mxu0 %v980
    %1086 = vmatprep.subr.bf16.mxu0 0
    %1087 = vmatpush2.bf16.msra.mxu0 %v979
    %1088 = vmatprep.subr.bf16.mxu0 0
    %1089 = vmatpush2.bf16.msra.mxu0 %v978
    %1090 = vmatprep.mubr.bf16.mxu0 %v754
    %1091 = vmatmul.mubr.bf16.gmra.mxu0 %v753
    %v1092 = vpop.f32.mrf.mxu0
    %v1093 = vadd.f32 %v1053, %v1092
    %v1094 = vpop.f32.mrf.mxu0
    %v1095 = vpop.f32.mrf.mxu0
    %v1096 = vpop.f32.mrf.mxu0
    %1097 = vdwg.mxu0
    %v1098 = vtanh.pop %v1093
    %1099 = vst [vmem:[#allocation11] sm:$0xff] %v1098
    %v1100 = vld [vmem:[#allocation10 + $0x4] sm:$0xf]
    %v1101 = vld [vmem:[#allocation10 + $0x20] sm:$0xf]
    %v1102 = vld [vmem:[#allocation10 + $0x3c] sm:$0xf]
    %v1103 = vld [vmem:[#allocation10 + $0x58] sm:$0xf]
    %v1104 = vld [vmem:[#allocation10 + $0x74] sm:$0xf]
    %v1105 = vld [vmem:[#allocation10 + $0x90] sm:$0xf]
    %v1106 = vld [vmem:[#allocation10 + $0xac] sm:$0xf]
    %v1107 = vld [vmem:[#allocation10 + $0xc8] sm:$0xf]
    %v1108 = vld [vmem:[#allocation10 + $0xe4] sm:$0xf]
    %v1109 = vld [vmem:[#allocation10 + $0x100] sm:$0xf]
    %v1110 = vld [vmem:[#allocation10 + $0x11c] sm:$0xf]
    %v1111 = vld [vmem:[#allocation10 + $0x138] sm:$0xf]
    %v1112 = vld [vmem:[#allocation10 + $0x154] sm:$0xf]
    %v1113 = vld [vmem:[#allocation10 + $0x170] sm:$0xf]
    %v1114 = vld [vmem:[#allocation10 + $0x18c] sm:$0xf]
    %v1115 = vld [vmem:[#allocation10 + $0x1a8] sm:$0xf]
    %v1116 = vld [vmem:[#allocation10 + $0x1c4] sm:$0xf]
    %v1117 = vld [vmem:[#allocation10 + $0x1e0] sm:$0xf]
    %v1118 = vld [vmem:[#allocation10 + $0x1fc] sm:$0xf]
    %v1119 = vld [vmem:[#allocation10 + $0x218] sm:$0xf]
    %v1120 = vld [vmem:[#allocation10 + $0x234] sm:$0xf]
    %v1121 = vld [vmem:[#allocation10 + $0x250] sm:$0xf]
    %v1122 = vld [vmem:[#allocation10 + $0x26c] sm:$0xf]
    %v1123 = vld [vmem:[#allocation10 + $0x288] sm:$0xf]
    %v1124 = vld [vmem:[#allocation10 + $0x2a4] sm:$0xf]
    %v1125 = vld [vmem:[#allocation10 + $0x2c0] sm:$0xf]
    %v1126 = vld [vmem:[#allocation10 + $0x2dc] sm:$0xf]
    %v1127 = vld [vmem:[#allocation10 + $0x2f8] sm:$0xf]
    %v1128 = vld [vmem:[#allocation10 + $0x314] sm:$0xf]
    %v1129 = vld [vmem:[#allocation10 + $0x330] sm:$0xf]
    %v1130 = vld [vmem:[#allocation10 + $0x34c] sm:$0xf]
    %v1131 = vld [vmem:[#allocation10 + $0x368] sm:$0xf]
    %v1132 = vld [vmem:[#allocation10 + $0x384] sm:$0xf]
    %v1133 = vld [vmem:[#allocation10 + $0x3a0] sm:$0xf]
    %v1134 = vld [vmem:[#allocation10 + $0x3bc] sm:$0xf]
    %v1135 = vld [vmem:[#allocation10 + $0x3d8] sm:$0xf]
    %v1136 = vld [vmem:[#allocation10 + $0x3f4] sm:$0xf]
    %v1137 = vld [vmem:[#allocation10 + $0x410] sm:$0xf]
    %v1138 = vld [vmem:[#allocation10 + $0x42c] sm:$0xf]
    %v1139 = vld [vmem:[#allocation10 + $0x448] sm:$0xf]
    %v1140 = vld [vmem:[#allocation10 + $0x464] sm:$0xf]
    %v1141 = vld [vmem:[#allocation10 + $0x480] sm:$0xf]
    %v1142 = vld [vmem:[#allocation10 + $0x49c] sm:$0xf]
    %v1143 = vld [vmem:[#allocation10 + $0x4b8] sm:$0xf]
    %v1144 = vld [vmem:[#allocation10 + $0x4d4] sm:$0xf]
    %v1145 = vld [vmem:[#allocation10 + $0x4f0] sm:$0xf]
    %v1146 = vld [vmem:[#allocation10 + $0x50c] sm:$0xf]
    %v1147 = vld [vmem:[#allocation10 + $0x528] sm:$0xf]
    %v1148 = vld [vmem:[#allocation10 + $0x544] sm:$0xf]
    %v1149 = vld [vmem:[#allocation10 + $0x560] sm:$0xf]
    %v1150 = vld [vmem:[#allocation10 + $0x57c] sm:$0xf]
    %v1151 = vld [vmem:[#allocation10 + $0x598] sm:$0xf]
    %v1152 = vld [vmem:[#allocation10 + $0x5b4] sm:$0xf]
    %v1153 = vld [vmem:[#allocation10 + $0x5d0] sm:$0xf]
    %v1154 = vld [vmem:[#allocation10 + $0x5ec] sm:$0xf]
    %v1155 = vld [vmem:[#allocation10 + $0x608] sm:$0xf]
    %v1156 = vld [vmem:[#allocation10 + $0x624] sm:$0xf]
    %v1157 = vld [vmem:[#allocation10 + $0x640] sm:$0xf]
    %v1158 = vld [vmem:[#allocation10 + $0x65c] sm:$0xf]
    %v1159 = vld [vmem:[#allocation10 + $0x678] sm:$0xf]
    %v1160 = vld [vmem:[#allocation10 + $0x694] sm:$0xf]
    %v1161 = vld [vmem:[#allocation10 + $0x6b0] sm:$0xf]
    %v1162 = vld [vmem:[#allocation10 + $0x6cc] sm:$0xf]
    %v1163 = vld [vmem:[#allocation10 + $0x6e8] sm:$0xf]
    %v1164 = vld [vmem:[%s6 + $0x1] sm:$0x1]
    %v1166 = vlaneseq
    %v1167 = vshrl.u32 %v1166, 7
    %v1168 = vsub.s32 0, %v1167
    %v1169 = vrot.slane %v1164, %v1168
    %v1235 = vunpack.c.l.b16 %v1100
    %v1236 = vunpack.c.l.b16 %v1101
    %v1237 = vunpack.c.l.b16 %v1102
    %v1238 = vunpack.c.l.b16 %v1103
    %v1239 = vunpack.c.l.b16 %v1104
    %v1240 = vunpack.c.l.b16 %v1105
    %v1241 = vunpack.c.l.b16 %v1106
    %v1242 = vunpack.c.l.b16 %v1107
    %v1243 = vunpack.c.l.b16 %v1108
    %v1244 = vunpack.c.l.b16 %v1109
    %v1245 = vunpack.c.l.b16 %v1110
    %v1246 = vunpack.c.l.b16 %v1111
    %v1247 = vunpack.c.l.b16 %v1112
    %v1248 = vunpack.c.l.b16 %v1113
    %v1249 = vunpack.c.l.b16 %v1114
    %v1250 = vunpack.c.l.b16 %v1115
    %v1251 = vunpack.c.l.b16 %v1116
    %v1252 = vunpack.c.l.b16 %v1117
    %v1253 = vunpack.c.l.b16 %v1118
    %v1254 = vunpack.c.l.b16 %v1119
    %v1255 = vunpack.c.l.b16 %v1120
    %v1256 = vunpack.c.l.b16 %v1121
    %v1257 = vunpack.c.l.b16 %v1122
    %v1258 = vunpack.c.l.b16 %v1123
    %v1259 = vunpack.c.l.b16 %v1124
    %v1260 = vunpack.c.l.b16 %v1125
    %v1261 = vunpack.c.l.b16 %v1126
    %v1262 = vunpack.c.l.b16 %v1127
    %v1263 = vunpack.c.l.b16 %v1128
    %v1264 = vunpack.c.l.b16 %v1129
    %v1265 = vunpack.c.l.b16 %v1130
    %v1266 = vunpack.c.l.b16 %v1131
    %v1267 = vunpack.c.l.b16 %v1132
    %v1268 = vunpack.c.l.b16 %v1133
    %v1269 = vunpack.c.l.b16 %v1134
    %v1270 = vunpack.c.l.b16 %v1135
    %v1271 = vunpack.c.l.b16 %v1136
    %v1272 = vunpack.c.l.b16 %v1137
    %v1273 = vunpack.c.l.b16 %v1138
    %v1274 = vunpack.c.l.b16 %v1139
    %v1275 = vunpack.c.l.b16 %v1140
    %v1276 = vunpack.c.l.b16 %v1141
    %v1277 = vunpack.c.l.b16 %v1142
    %v1278 = vunpack.c.l.b16 %v1143
    %v1279 = vunpack.c.l.b16 %v1144
    %v1280 = vunpack.c.l.b16 %v1145
    %v1281 = vunpack.c.l.b16 %v1146
    %v1282 = vunpack.c.l.b16 %v1147
    %v1283 = vunpack.c.l.b16 %v1148
    %v1284 = vunpack.c.l.b16 %v1149
    %v1285 = vunpack.c.l.b16 %v1150
    %v1286 = vunpack.c.l.b16 %v1151
    %v1287 = vunpack.c.l.b16 %v1152
    %v1288 = vunpack.c.l.b16 %v1153
    %v1289 = vunpack.c.l.b16 %v1154
    %v1290 = vunpack.c.l.b16 %v1155
    %v1291 = vunpack.c.l.b16 %v1156
    %v1292 = vunpack.c.l.b16 %v1157
    %v1293 = vunpack.c.l.b16 %v1158
    %v1294 = vunpack.c.l.b16 %v1159
    %v1295 = vunpack.c.l.b16 %v1160
    %v1296 = vunpack.c.l.b16 %v1161
    %v1297 = vunpack.c.l.b16 %v1162
    %v1298 = vunpack.c.l.b16 %v1163
    %v1299 = vpack.c.b16 %v1236, %v1235
    %v1300 = vpack.c.b16 %v1238, %v1237
    %v1301 = vpack.c.b16 %v1240, %v1239
    %v1302 = vpack.c.b16 %v1242, %v1241
    %v1303 = vpack.c.b16 %v1244, %v1243
    %v1304 = vpack.c.b16 %v1246, %v1245
    %v1305 = vpack.c.b16 %v1248, %v1247
    %v1306 = vpack.c.b16 %v1250, %v1249
    %v1307 = vpack.c.b16 %v1252, %v1251
    %v1308 = vpack.c.b16 %v1254, %v1253
    %v1309 = vpack.c.b16 %v1256, %v1255
    %v1310 = vpack.c.b16 %v1258, %v1257
    %v1311 = vpack.c.b16 %v1260, %v1259
    %v1312 = vpack.c.b16 %v1262, %v1261
    %v1313 = vpack.c.b16 %v1264, %v1263
    %v1314 = vpack.c.b16 %v1266, %v1265
    %v1315 = vpack.c.b16 %v1268, %v1267
    %v1316 = vpack.c.b16 %v1270, %v1269
    %v1317 = vpack.c.b16 %v1272, %v1271
    %v1318 = vpack.c.b16 %v1274, %v1273
    %v1319 = vpack.c.b16 %v1276, %v1275
    %v1320 = vpack.c.b16 %v1278, %v1277
    %v1321 = vpack.c.b16 %v1280, %v1279
    %v1322 = vpack.c.b16 %v1282, %v1281
    %v1323 = vpack.c.b16 %v1284, %v1283
    %v1324 = vpack.c.b16 %v1286, %v1285
    %v1325 = vpack.c.b16 %v1288, %v1287
    %v1326 = vpack.c.b16 %v1290, %v1289
    %v1327 = vpack.c.b16 %v1292, %v1291
    %v1328 = vpack.c.b16 %v1294, %v1293
    %v1329 = vpack.c.b16 %v1296, %v1295
    %v1330 = vpack.c.b16 %v1298, %v1297
    %1363 = vmatprep.subr.bf16.mxu0 0
    %1364 = vmatpush1.bf16.msra.mxu0 %v1306
    %1365 = vmatprep.subr.bf16.mxu0 0
    %1366 = vmatpush1.bf16.msra.mxu0 %v1305
    %1367 = vmatprep.subr.bf16.mxu0 0
    %1368 = vmatpush1.bf16.msra.mxu0 %v1304
    %1369 = vmatprep.subr.bf16.mxu0 0
    %1370 = vmatpush1.bf16.msra.mxu0 %v1303
    %1371 = vmatprep.subr.bf16.mxu0 0
    %1372 = vmatpush1.bf16.msra.mxu0 %v1302
    %1373 = vmatprep.subr.bf16.mxu0 0
    %1374 = vmatpush1.bf16.msra.mxu0 %v1301
    %1375 = vmatprep.subr.bf16.mxu0 0
    %1376 = vmatpush1.bf16.msra.mxu0 %v1300
    %1377 = vmatprep.subr.bf16.mxu0 0
    %1378 = vmatpush1.bf16.msra.mxu0 %v1299
    %1379 = vmatprep.subr.bf16.mxu0 0
    %1380 = vmatpush2.bf16.msra.mxu0 %v1314
    %1381 = vmatprep.subr.bf16.mxu0 0
    %1382 = vmatpush2.bf16.msra.mxu0 %v1313
    %1383 = vmatprep.subr.bf16.mxu0 0
    %1384 = vmatpush2.bf16.msra.mxu0 %v1312
    %1385 = vmatprep.subr.bf16.mxu0 0
    %1386 = vmatpush2.bf16.msra.mxu0 %v1311
    %1387 = vmatprep.subr.bf16.mxu0 0
    %1388 = vmatpush2.bf16.msra.mxu0 %v1310
    %1389 = vmatprep.subr.bf16.mxu0 0
    %1390 = vmatpush2.bf16.msra.mxu0 %v1309
    %1391 = vmatprep.subr.bf16.mxu0 0
    %1392 = vmatpush2.bf16.msra.mxu0 %v1308
    %1393 = vmatprep.subr.bf16.mxu0 0
    %1394 = vmatpush2.bf16.msra.mxu0 %v1307
    %1395 = vmatprep.mubr.bf16.mxu0 %v752
    %1396 = vmatmul.mubr.bf16.gmra.mxu0 %v751
    %v1397 = vpop.f32.mrf.mxu0
    %v1398 = vadd.f32 %v1169, %v1397
    %v1399 = vpop.f32.mrf.mxu0
    %v1400 = vpop.f32.mrf.mxu0
    %v1401 = vpop.f32.mrf.mxu0
    %1402 = vdwg.mxu0
    %1403 = vmatprep.subr.bf16.mxu0 0
    %1404 = vmatpush1.bf16.msra.mxu0 %v1322
    %1405 = vmatprep.subr.bf16.mxu0 0
    %1406 = vmatpush1.bf16.msra.mxu0 %v1321
    %1407 = vmatprep.subr.bf16.mxu0 0
    %1408 = vmatpush1.bf16.msra.mxu0 %v1320
    %1409 = vmatprep.subr.bf16.mxu0 0
    %1410 = vmatpush1.bf16.msra.mxu0 %v1319
    %1411 = vmatprep.subr.bf16.mxu0 0
    %1412 = vmatpush1.bf16.msra.mxu0 %v1318
    %1413 = vmatprep.subr.bf16.mxu0 0
    %1414 = vmatpush1.bf16.msra.mxu0 %v1317
    %1415 = vmatprep.subr.bf16.mxu0 0
    %1416 = vmatpush1.bf16.msra.mxu0 %v1316
    %1417 = vmatprep.subr.bf16.mxu0 0
    %1418 = vmatpush1.bf16.msra.mxu0 %v1315
    %1419 = vmatprep.subr.bf16.mxu0 0
    %1420 = vmatpush2.bf16.msra.mxu0 %v1330
    %1421 = vmatprep.subr.bf16.mxu0 0
    %1422 = vmatpush2.bf16.msra.mxu0 %v1329
    %1423 = vmatprep.subr.bf16.mxu0 0
    %1424 = vmatpush2.bf16.msra.mxu0 %v1328
    %1425 = vmatprep.subr.bf16.mxu0 0
    %1426 = vmatpush2.bf16.msra.mxu0 %v1327
    %1427 = vmatprep.subr.bf16.mxu0 0
    %1428 = vmatpush2.bf16.msra.mxu0 %v1326
    %1429 = vmatprep.subr.bf16.mxu0 0
    %1430 = vmatpush2.bf16.msra.mxu0 %v1325
    %1431 = vmatprep.subr.bf16.mxu0 0
    %1432 = vmatpush2.bf16.msra.mxu0 %v1324
    %1433 = vmatprep.subr.bf16.mxu0 0
    %1434 = vmatpush2.bf16.msra.mxu0 %v1323
    %1435 = vmatprep.mubr.bf16.mxu0 %v754
    %1436 = vmatmul.mubr.bf16.gmra.mxu0 %v753
    %v1437 = vpop.f32.mrf.mxu0
    %v1438 = vadd.f32 %v1398, %v1437
    %v1439 = vpop.f32.mrf.mxu0
    %v1440 = vpop.f32.mrf.mxu0
    %v1441 = vpop.f32.mrf.mxu0
    %1442 = vdwg.mxu0
    %v1443 = vtanh.pop %v1438
    %1444 = vst [vmem:[#allocation11 + $0x8] sm:$0xff] %v1443
    %v1445 = vld [vmem:[#allocation10 + $0x8] sm:$0xf]
    %v1446 = vld [vmem:[#allocation10 + $0x24] sm:$0xf]
    %v1447 = vld [vmem:[#allocation10 + $0x40] sm:$0xf]
    %v1448 = vld [vmem:[#allocation10 + $0x5c] sm:$0xf]
    %v1449 = vld [vmem:[#allocation10 + $0x78] sm:$0xf]
    %v1450 = vld [vmem:[#allocation10 + $0x94] sm:$0xf]
    %v1451 = vld [vmem:[#allocation10 + $0xb0] sm:$0xf]
    %v1452 = vld [vmem:[#allocation10 + $0xcc] sm:$0xf]
    %v1453 = vld [vmem:[#allocation10 + $0xe8] sm:$0xf]
    %v1454 = vld [vmem:[#allocation10 + $0x104] sm:$0xf]
    %v1455 = vld [vmem:[#allocation10 + $0x120] sm:$0xf]
    %v1456 = vld [vmem:[#allocation10 + $0x13c] sm:$0xf]
    %v1457 = vld [vmem:[#allocation10 + $0x158] sm:$0xf]
    %v1458 = vld [vmem:[#allocation10 + $0x174] sm:$0xf]
    %v1459 = vld [vmem:[#allocation10 + $0x190] sm:$0xf]
    %v1460 = vld [vmem:[#allocation10 + $0x1ac] sm:$0xf]
    %v1461 = vld [vmem:[#allocation10 + $0x1c8] sm:$0xf]
    %v1462 = vld [vmem:[#allocation10 + $0x1e4] sm:$0xf]
    %v1463 = vld [vmem:[#allocation10 + $0x200] sm:$0xf]
    %v1464 = vld [vmem:[#allocation10 + $0x21c] sm:$0xf]
    %v1465 = vld [vmem:[#allocation10 + $0x238] sm:$0xf]
    %v1466 = vld [vmem:[#allocation10 + $0x254] sm:$0xf]
    %v1467 = vld [vmem:[#allocation10 + $0x270] sm:$0xf]
    %v1468 = vld [vmem:[#allocation10 + $0x28c] sm:$0xf]
    %v1469 = vld [vmem:[#allocation10 + $0x2a8] sm:$0xf]
    %v1470 = vld [vmem:[#allocation10 + $0x2c4] sm:$0xf]
    %v1471 = vld [vmem:[#allocation10 + $0x2e0] sm:$0xf]
    %v1472 = vld [vmem:[#allocation10 + $0x2fc] sm:$0xf]
    %v1473 = vld [vmem:[#allocation10 + $0x318] sm:$0xf]
    %v1474 = vld [vmem:[#allocation10 + $0x334] sm:$0xf]
    %v1475 = vld [vmem:[#allocation10 + $0x350] sm:$0xf]
    %v1476 = vld [vmem:[#allocation10 + $0x36c] sm:$0xf]
    %v1477 = vld [vmem:[#allocation10 + $0x388] sm:$0xf]
    %v1478 = vld [vmem:[#allocation10 + $0x3a4] sm:$0xf]
    %v1479 = vld [vmem:[#allocation10 + $0x3c0] sm:$0xf]
    %v1480 = vld [vmem:[#allocation10 + $0x3dc] sm:$0xf]
    %v1481 = vld [vmem:[#allocation10 + $0x3f8] sm:$0xf]
    %v1482 = vld [vmem:[#allocation10 + $0x414] sm:$0xf]
    %v1483 = vld [vmem:[#allocation10 + $0x430] sm:$0xf]
    %v1484 = vld [vmem:[#allocation10 + $0x44c] sm:$0xf]
    %v1485 = vld [vmem:[#allocation10 + $0x468] sm:$0xf]
    %v1486 = vld [vmem:[#allocation10 + $0x484] sm:$0xf]
    %v1487 = vld [vmem:[#allocation10 + $0x4a0] sm:$0xf]
    %v1488 = vld [vmem:[#allocation10 + $0x4bc] sm:$0xf]
    %v1489 = vld [vmem:[#allocation10 + $0x4d8] sm:$0xf]
    %v1490 = vld [vmem:[#allocation10 + $0x4f4] sm:$0xf]
    %v1491 = vld [vmem:[#allocation10 + $0x510] sm:$0xf]
    %v1492 = vld [vmem:[#allocation10 + $0x52c] sm:$0xf]
    %v1493 = vld [vmem:[#allocation10 + $0x548] sm:$0xf]
    %v1494 = vld [vmem:[#allocation10 + $0x564] sm:$0xf]
    %v1495 = vld [vmem:[#allocation10 + $0x580] sm:$0xf]
    %v1496 = vld [vmem:[#allocation10 + $0x59c] sm:$0xf]
    %v1497 = vld [vmem:[#allocation10 + $0x5b8] sm:$0xf]
    %v1498 = vld [vmem:[#allocation10 + $0x5d4] sm:$0xf]
    %v1499 = vld [vmem:[#allocation10 + $0x5f0] sm:$0xf]
    %v1500 = vld [vmem:[#allocation10 + $0x60c] sm:$0xf]
    %v1501 = vld [vmem:[#allocation10 + $0x628] sm:$0xf]
    %v1502 = vld [vmem:[#allocation10 + $0x644] sm:$0xf]
    %v1503 = vld [vmem:[#allocation10 + $0x660] sm:$0xf]
    %v1504 = vld [vmem:[#allocation10 + $0x67c] sm:$0xf]
    %v1505 = vld [vmem:[#allocation10 + $0x698] sm:$0xf]
    %v1506 = vld [vmem:[#allocation10 + $0x6b4] sm:$0xf]
    %v1507 = vld [vmem:[#allocation10 + $0x6d0] sm:$0xf]
    %v1508 = vld [vmem:[#allocation10 + $0x6ec] sm:$0xf]
    %v1509 = vld [vmem:[%s6 + $0x2] sm:$0x1]
    %v1511 = vlaneseq
    %v1512 = vshrl.u32 %v1511, 7
    %v1513 = vsub.s32 0, %v1512
    %v1514 = vrot.slane %v1509, %v1513
    %v1580 = vunpack.c.l.b16 %v1445
    %v1581 = vunpack.c.l.b16 %v1446
    %v1582 = vunpack.c.l.b16 %v1447
    %v1583 = vunpack.c.l.b16 %v1448
    %v1584 = vunpack.c.l.b16 %v1449
    %v1585 = vunpack.c.l.b16 %v1450
    %v1586 = vunpack.c.l.b16 %v1451
    %v1587 = vunpack.c.l.b16 %v1452
    %v1588 = vunpack.c.l.b16 %v1453
    %v1589 = vunpack.c.l.b16 %v1454
    %v1590 = vunpack.c.l.b16 %v1455
    %v1591 = vunpack.c.l.b16 %v1456
    %v1592 = vunpack.c.l.b16 %v1457
    %v1593 = vunpack.c.l.b16 %v1458
    %v1594 = vunpack.c.l.b16 %v1459
    %v1595 = vunpack.c.l.b16 %v1460
    %v1596 = vunpack.c.l.b16 %v1461
    %v1597 = vunpack.c.l.b16 %v1462
    %v1598 = vunpack.c.l.b16 %v1463
    %v1599 = vunpack.c.l.b16 %v1464
    %v1600 = vunpack.c.l.b16 %v1465
    %v1601 = vunpack.c.l.b16 %v1466
    %v1602 = vunpack.c.l.b16 %v1467
    %v1603 = vunpack.c.l.b16 %v1468
    %v1604 = vunpack.c.l.b16 %v1469
    %v1605 = vunpack.c.l.b16 %v1470
    %v1606 = vunpack.c.l.b16 %v1471
    %v1607 = vunpack.c.l.b16 %v1472
    %v1608 = vunpack.c.l.b16 %v1473
    %v1609 = vunpack.c.l.b16 %v1474
    %v1610 = vunpack.c.l.b16 %v1475
    %v1611 = vunpack.c.l.b16 %v1476
    %v1612 = vunpack.c.l.b16 %v1477
    %v1613 = vunpack.c.l.b16 %v1478
    %v1614 = vunpack.c.l.b16 %v1479
    %v1615 = vunpack.c.l.b16 %v1480
    %v1616 = vunpack.c.l.b16 %v1481
    %v1617 = vunpack.c.l.b16 %v1482
    %v1618 = vunpack.c.l.b16 %v1483
    %v1619 = vunpack.c.l.b16 %v1484
    %v1620 = vunpack.c.l.b16 %v1485
    %v1621 = vunpack.c.l.b16 %v1486
    %v1622 = vunpack.c.l.b16 %v1487
    %v1623 = vunpack.c.l.b16 %v1488
    %v1624 = vunpack.c.l.b16 %v1489
    %v1625 = vunpack.c.l.b16 %v1490
    %v1626 = vunpack.c.l.b16 %v1491
    %v1627 = vunpack.c.l.b16 %v1492
    %v1628 = vunpack.c.l.b16 %v1493
    %v1629 = vunpack.c.l.b16 %v1494
    %v1630 = vunpack.c.l.b16 %v1495
    %v1631 = vunpack.c.l.b16 %v1496
    %v1632 = vunpack.c.l.b16 %v1497
    %v1633 = vunpack.c.l.b16 %v1498
    %v1634 = vunpack.c.l.b16 %v1499
    %v1635 = vunpack.c.l.b16 %v1500
    %v1636 = vunpack.c.l.b16 %v1501
    %v1637 = vunpack.c.l.b16 %v1502
    %v1638 = vunpack.c.l.b16 %v1503
    %v1639 = vunpack.c.l.b16 %v1504
    %v1640 = vunpack.c.l.b16 %v1505
    %v1641 = vunpack.c.l.b16 %v1506
    %v1642 = vunpack.c.l.b16 %v1507
    %v1643 = vunpack.c.l.b16 %v1508
    %v1644 = vpack.c.b16 %v1581, %v1580
    %v1645 = vpack.c.b16 %v1583, %v1582
    %v1646 = vpack.c.b16 %v1585, %v1584
    %v1647 = vpack.c.b16 %v1587, %v1586
    %v1648 = vpack.c.b16 %v1589, %v1588
    %v1649 = vpack.c.b16 %v1591, %v1590
    %v1650 = vpack.c.b16 %v1593, %v1592
    %v1651 = vpack.c.b16 %v1595, %v1594
    %v1652 = vpack.c.b16 %v1597, %v1596
    %v1653 = vpack.c.b16 %v1599, %v1598
    %v1654 = vpack.c.b16 %v1601, %v1600
    %v1655 = vpack.c.b16 %v1603, %v1602
    %v1656 = vpack.c.b16 %v1605, %v1604
    %v1657 = vpack.c.b16 %v1607, %v1606
    %v1658 = vpack.c.b16 %v1609, %v1608
    %v1659 = vpack.c.b16 %v1611, %v1610
    %v1660 = vpack.c.b16 %v1613, %v1612
    %v1661 = vpack.c.b16 %v1615, %v1614
    %v1662 = vpack.c.b16 %v1617, %v1616
    %v1663 = vpack.c.b16 %v1619, %v1618
    %v1664 = vpack.c.b16 %v1621, %v1620
    %v1665 = vpack.c.b16 %v1623, %v1622
    %v1666 = vpack.c.b16 %v1625, %v1624
    %v1667 = vpack.c.b16 %v1627, %v1626
    %v1668 = vpack.c.b16 %v1629, %v1628
    %v1669 = vpack.c.b16 %v1631, %v1630
    %v1670 = vpack.c.b16 %v1633, %v1632
    %v1671 = vpack.c.b16 %v1635, %v1634
    %v1672 = vpack.c.b16 %v1637, %v1636
    %v1673 = vpack.c.b16 %v1639, %v1638
    %v1674 = vpack.c.b16 %v1641, %v1640
    %v1675 = vpack.c.b16 %v1643, %v1642
    %1708 = vmatprep.subr.bf16.mxu0 0
    %1709 = vmatpush1.bf16.msra.mxu0 %v1651
    %1710 = vmatprep.subr.bf16.mxu0 0
    %1711 = vmatpush1.bf16.msra.mxu0 %v1650
    %1712 = vmatprep.subr.bf16.mxu0 0
    %1713 = vmatpush1.bf16.msra.mxu0 %v1649
    %1714 = vmatprep.subr.bf16.mxu0 0
    %1715 = vmatpush1.bf16.msra.mxu0 %v1648
    %1716 = vmatprep.subr.bf16.mxu0 0
    %1717 = vmatpush1.bf16.msra.mxu0 %v1647
    %1718 = vmatprep.subr.bf16.mxu0 0
    %1719 = vmatpush1.bf16.msra.mxu0 %v1646
    %1720 = vmatprep.subr.bf16.mxu0 0
    %1721 = vmatpush1.bf16.msra.mxu0 %v1645
    %1722 = vmatprep.subr.bf16.mxu0 0
    %1723 = vmatpush1.bf16.msra.mxu0 %v1644
    %1724 = vmatprep.subr.bf16.mxu0 0
    %1725 = vmatpush2.bf16.msra.mxu0 %v1659
    %1726 = vmatprep.subr.bf16.mxu0 0
    %1727 = vmatpush2.bf16.msra.mxu0 %v1658
    %1728 = vmatprep.subr.bf16.mxu0 0
    %1729 = vmatpush2.bf16.msra.mxu0 %v1657
    %1730 = vmatprep.subr.bf16.mxu0 0
    %1731 = vmatpush2.bf16.msra.mxu0 %v1656
    %1732 = vmatprep.subr.bf16.mxu0 0
    %1733 = vmatpush2.bf16.msra.mxu0 %v1655
    %1734 = vmatprep.subr.bf16.mxu0 0
    %1735 = vmatpush2.bf16.msra.mxu0 %v1654
    %1736 = vmatprep.subr.bf16.mxu0 0
    %1737 = vmatpush2.bf16.msra.mxu0 %v1653
    %1738 = vmatprep.subr.bf16.mxu0 0
    %1739 = vmatpush2.bf16.msra.mxu0 %v1652
    %1740 = vmatprep.mubr.bf16.mxu0 %v752
    %1741 = vmatmul.mubr.bf16.gmra.mxu0 %v751
    %v1742 = vpop.f32.mrf.mxu0
    %v1743 = vadd.f32 %v1514, %v1742
    %v1744 = vpop.f32.mrf.mxu0
    %v1745 = vpop.f32.mrf.mxu0
    %v1746 = vpop.f32.mrf.mxu0
    %1747 = vdwg.mxu0
    %1748 = vmatprep.subr.bf16.mxu0 0
    %1749 = vmatpush1.bf16.msra.mxu0 %v1667
    %1750 = vmatprep.subr.bf16.mxu0 0
    %1751 = vmatpush1.bf16.msra.mxu0 %v1666
    %1752 = vmatprep.subr.bf16.mxu0 0
    %1753 = vmatpush1.bf16.msra.mxu0 %v1665
    %1754 = vmatprep.subr.bf16.mxu0 0
    %1755 = vmatpush1.bf16.msra.mxu0 %v1664
    %1756 = vmatprep.subr.bf16.mxu0 0
    %1757 = vmatpush1.bf16.msra.mxu0 %v1663
    %1758 = vmatprep.subr.bf16.mxu0 0
    %1759 = vmatpush1.bf16.msra.mxu0 %v1662
    %1760 = vmatprep.subr.bf16.mxu0 0
    %1761 = vmatpush1.bf16.msra.mxu0 %v1661
    %1762 = vmatprep.subr.bf16.mxu0 0
    %1763 = vmatpush1.bf16.msra.mxu0 %v1660
    %1764 = vmatprep.subr.bf16.mxu0 0
    %1765 = vmatpush2.bf16.msra.mxu0 %v1675
    %1766 = vmatprep.subr.bf16.mxu0 0
    %1767 = vmatpush2.bf16.msra.mxu0 %v1674
    %1768 = vmatprep.subr.bf16.mxu0 0
    %1769 = vmatpush2.bf16.msra.mxu0 %v1673
    %1770 = vmatprep.subr.bf16.mxu0 0
    %1771 = vmatpush2.bf16.msra.mxu0 %v1672
    %1772 = vmatprep.subr.bf16.mxu0 0
    %1773 = vmatpush2.bf16.msra.mxu0 %v1671
    %1774 = vmatprep.subr.bf16.mxu0 0
    %1775 = vmatpush2.bf16.msra.mxu0 %v1670
    %1776 = vmatprep.subr.bf16.mxu0 0
    %1777 = vmatpush2.bf16.msra.mxu0 %v1669
    %1778 = vmatprep.subr.bf16.mxu0 0
    %1779 = vmatpush2.bf16.msra.mxu0 %v1668
    %1780 = vmatprep.mubr.bf16.mxu0 %v754
    %1781 = vmatmul.mubr.bf16.gmra.mxu0 %v753
    %v1782 = vpop.f32.mrf.mxu0
    %v1783 = vadd.f32 %v1743, %v1782
    %v1784 = vpop.f32.mrf.mxu0
    %v1785 = vpop.f32.mrf.mxu0
    %v1786 = vpop.f32.mrf.mxu0
    %1787 = vdwg.mxu0
    %v1788 = vtanh.pop %v1783
    %1789 = vst [vmem:[#allocation11 + $0x10] sm:$0xff] %v1788
    %v1790 = vld [vmem:[#allocation10 + $0xc] sm:$0xf]
    %v1791 = vld [vmem:[#allocation10 + $0x28] sm:$0xf]
    %v1792 = vld [vmem:[#allocation10 + $0x44] sm:$0xf]
    %v1793 = vld [vmem:[#allocation10 + $0x60] sm:$0xf]
    %v1794 = vld [vmem:[#allocation10 + $0x7c] sm:$0xf]
    %v1795 = vld [vmem:[#allocation10 + $0x98] sm:$0xf]
    %v1796 = vld [vmem:[#allocation10 + $0xb4] sm:$0xf]
    %v1797 = vld [vmem:[#allocation10 + $0xd0] sm:$0xf]
    %v1798 = vld [vmem:[#allocation10 + $0xec] sm:$0xf]
    %v1799 = vld [vmem:[#allocation10 + $0x108] sm:$0xf]
    %v1800 = vld [vmem:[#allocation10 + $0x124] sm:$0xf]
    %v1801 = vld [vmem:[#allocation10 + $0x140] sm:$0xf]
    %v1802 = vld [vmem:[#allocation10 + $0x15c] sm:$0xf]
    %v1803 = vld [vmem:[#allocation10 + $0x178] sm:$0xf]
    %v1804 = vld [vmem:[#allocation10 + $0x194] sm:$0xf]
    %v1805 = vld [vmem:[#allocation10 + $0x1b0] sm:$0xf]
    %v1806 = vld [vmem:[#allocation10 + $0x1cc] sm:$0xf]
    %v1807 = vld [vmem:[#allocation10 + $0x1e8] sm:$0xf]
    %v1808 = vld [vmem:[#allocation10 + $0x204] sm:$0xf]
    %v1809 = vld [vmem:[#allocation10 + $0x220] sm:$0xf]
    %v1810 = vld [vmem:[#allocation10 + $0x23c] sm:$0xf]
    %v1811 = vld [vmem:[#allocation10 + $0x258] sm:$0xf]
    %v1812 = vld [vmem:[#allocation10 + $0x274] sm:$0xf]
    %v1813 = vld [vmem:[#allocation10 + $0x290] sm:$0xf]
    %v1814 = vld [vmem:[#allocation10 + $0x2ac] sm:$0xf]
    %v1815 = vld [vmem:[#allocation10 + $0x2c8] sm:$0xf]
    %v1816 = vld [vmem:[#allocation10 + $0x2e4] sm:$0xf]
    %v1817 = vld [vmem:[#allocation10 + $0x300] sm:$0xf]
    %v1818 = vld [vmem:[#allocation10 + $0x31c] sm:$0xf]
    %v1819 = vld [vmem:[#allocation10 + $0x338] sm:$0xf]
    %v1820 = vld [vmem:[#allocation10 + $0x354] sm:$0xf]
    %v1821 = vld [vmem:[#allocation10 + $0x370] sm:$0xf]
    %v1822 = vld [vmem:[#allocation10 + $0x38c] sm:$0xf]
    %v1823 = vld [vmem:[#allocation10 + $0x3a8] sm:$0xf]
    %v1824 = vld [vmem:[#allocation10 + $0x3c4] sm:$0xf]
    %v1825 = vld [vmem:[#allocation10 + $0x3e0] sm:$0xf]
    %v1826 = vld [vmem:[#allocation10 + $0x3fc] sm:$0xf]
    %v1827 = vld [vmem:[#allocation10 + $0x418] sm:$0xf]
    %v1828 = vld [vmem:[#allocation10 + $0x434] sm:$0xf]
    %v1829 = vld [vmem:[#allocation10 + $0x450] sm:$0xf]
    %v1830 = vld [vmem:[#allocation10 + $0x46c] sm:$0xf]
    %v1831 = vld [vmem:[#allocation10 + $0x488] sm:$0xf]
    %v1832 = vld [vmem:[#allocation10 + $0x4a4] sm:$0xf]
    %v1833 = vld [vmem:[#allocation10 + $0x4c0] sm:$0xf]
    %v1834 = vld [vmem:[#allocation10 + $0x4dc] sm:$0xf]
    %v1835 = vld [vmem:[#allocation10 + $0x4f8] sm:$0xf]
    %v1836 = vld [vmem:[#allocation10 + $0x514] sm:$0xf]
    %v1837 = vld [vmem:[#allocation10 + $0x530] sm:$0xf]
    %v1838 = vld [vmem:[#allocation10 + $0x54c] sm:$0xf]
    %v1839 = vld [vmem:[#allocation10 + $0x568] sm:$0xf]
    %v1840 = vld [vmem:[#allocation10 + $0x584] sm:$0xf]
    %v1841 = vld [vmem:[#allocation10 + $0x5a0] sm:$0xf]
    %v1842 = vld [vmem:[#allocation10 + $0x5bc] sm:$0xf]
    %v1843 = vld [vmem:[#allocation10 + $0x5d8] sm:$0xf]
    %v1844 = vld [vmem:[#allocation10 + $0x5f4] sm:$0xf]
    %v1845 = vld [vmem:[#allocation10 + $0x610] sm:$0xf]
    %v1846 = vld [vmem:[#allocation10 + $0x62c] sm:$0xf]
    %v1847 = vld [vmem:[#allocation10 + $0x648] sm:$0xf]
    %v1848 = vld [vmem:[#allocation10 + $0x664] sm:$0xf]
    %v1849 = vld [vmem:[#allocation10 + $0x680] sm:$0xf]
    %v1850 = vld [vmem:[#allocation10 + $0x69c] sm:$0xf]
    %v1851 = vld [vmem:[#allocation10 + $0x6b8] sm:$0xf]
    %v1852 = vld [vmem:[#allocation10 + $0x6d4] sm:$0xf]
    %v1853 = vld [vmem:[#allocation10 + $0x6f0] sm:$0xf]
    %v1854 = vld [vmem:[%s6 + $0x3] sm:$0x1]
    %v1856 = vlaneseq
    %v1857 = vshrl.u32 %v1856, 7
    %v1858 = vsub.s32 0, %v1857
    %v1859 = vrot.slane %v1854, %v1858
    %v1925 = vunpack.c.l.b16 %v1790
    %v1926 = vunpack.c.l.b16 %v1791
    %v1927 = vunpack.c.l.b16 %v1792
    %v1928 = vunpack.c.l.b16 %v1793
    %v1929 = vunpack.c.l.b16 %v1794
    %v1930 = vunpack.c.l.b16 %v1795
    %v1931 = vunpack.c.l.b16 %v1796
    %v1932 = vunpack.c.l.b16 %v1797
    %v1933 = vunpack.c.l.b16 %v1798
    %v1934 = vunpack.c.l.b16 %v1799
    %v1935 = vunpack.c.l.b16 %v1800
    %v1936 = vunpack.c.l.b16 %v1801
    %v1937 = vunpack.c.l.b16 %v1802
    %v1938 = vunpack.c.l.b16 %v1803
    %v1939 = vunpack.c.l.b16 %v1804
    %v1940 = vunpack.c.l.b16 %v1805
    %v1941 = vunpack.c.l.b16 %v1806
    %v1942 = vunpack.c.l.b16 %v1807
    %v1943 = vunpack.c.l.b16 %v1808
    %v1944 = vunpack.c.l.b16 %v1809
    %v1945 = vunpack.c.l.b16 %v1810
    %v1946 = vunpack.c.l.b16 %v1811
    %v1947 = vunpack.c.l.b16 %v1812
    %v1948 = vunpack.c.l.b16 %v1813
    %v1949 = vunpack.c.l.b16 %v1814
    %v1950 = vunpack.c.l.b16 %v1815
    %v1951 = vunpack.c.l.b16 %v1816
    %v1952 = vunpack.c.l.b16 %v1817
    %v1953 = vunpack.c.l.b16 %v1818
    %v1954 = vunpack.c.l.b16 %v1819
    %v1955 = vunpack.c.l.b16 %v1820
    %v1956 = vunpack.c.l.b16 %v1821
    %v1957 = vunpack.c.l.b16 %v1822
    %v1958 = vunpack.c.l.b16 %v1823
    %v1959 = vunpack.c.l.b16 %v1824
    %v1960 = vunpack.c.l.b16 %v1825
    %v1961 = vunpack.c.l.b16 %v1826
    %v1962 = vunpack.c.l.b16 %v1827
    %v1963 = vunpack.c.l.b16 %v1828
    %v1964 = vunpack.c.l.b16 %v1829
    %v1965 = vunpack.c.l.b16 %v1830
    %v1966 = vunpack.c.l.b16 %v1831
    %v1967 = vunpack.c.l.b16 %v1832
    %v1968 = vunpack.c.l.b16 %v1833
    %v1969 = vunpack.c.l.b16 %v1834
    %v1970 = vunpack.c.l.b16 %v1835
    %v1971 = vunpack.c.l.b16 %v1836
    %v1972 = vunpack.c.l.b16 %v1837
    %v1973 = vunpack.c.l.b16 %v1838
    %v1974 = vunpack.c.l.b16 %v1839
    %v1975 = vunpack.c.l.b16 %v1840
    %v1976 = vunpack.c.l.b16 %v1841
    %v1977 = vunpack.c.l.b16 %v1842
    %v1978 = vunpack.c.l.b16 %v1843
    %v1979 = vunpack.c.l.b16 %v1844
    %v1980 = vunpack.c.l.b16 %v1845
    %v1981 = vunpack.c.l.b16 %v1846
    %v1982 = vunpack.c.l.b16 %v1847
    %v1983 = vunpack.c.l.b16 %v1848
    %v1984 = vunpack.c.l.b16 %v1849
    %v1985 = vunpack.c.l.b16 %v1850
    %v1986 = vunpack.c.l.b16 %v1851
    %v1987 = vunpack.c.l.b16 %v1852
    %v1988 = vunpack.c.l.b16 %v1853
    %v1989 = vpack.c.b16 %v1926, %v1925
    %v1990 = vpack.c.b16 %v1928, %v1927
    %v1991 = vpack.c.b16 %v1930, %v1929
    %v1992 = vpack.c.b16 %v1932, %v1931
    %v1993 = vpack.c.b16 %v1934, %v1933
    %v1994 = vpack.c.b16 %v1936, %v1935
    %v1995 = vpack.c.b16 %v1938, %v1937
    %v1996 = vpack.c.b16 %v1940, %v1939
    %v1997 = vpack.c.b16 %v1942, %v1941
    %v1998 = vpack.c.b16 %v1944, %v1943
    %v1999 = vpack.c.b16 %v1946, %v1945
    %v2000 = vpack.c.b16 %v1948, %v1947
    %v2001 = vpack.c.b16 %v1950, %v1949
    %v2002 = vpack.c.b16 %v1952, %v1951
    %v2003 = vpack.c.b16 %v1954, %v1953
    %v2004 = vpack.c.b16 %v1956, %v1955
    %v2005 = vpack.c.b16 %v1958, %v1957
    %v2006 = vpack.c.b16 %v1960, %v1959
    %v2007 = vpack.c.b16 %v1962, %v1961
    %v2008 = vpack.c.b16 %v1964, %v1963
    %v2009 = vpack.c.b16 %v1966, %v1965
    %v2010 = vpack.c.b16 %v1968, %v1967
    %v2011 = vpack.c.b16 %v1970, %v1969
    %v2012 = vpack.c.b16 %v1972, %v1971
    %v2013 = vpack.c.b16 %v1974, %v1973
    %v2014 = vpack.c.b16 %v1976, %v1975
    %v2015 = vpack.c.b16 %v1978, %v1977
    %v2016 = vpack.c.b16 %v1980, %v1979
    %v2017 = vpack.c.b16 %v1982, %v1981
    %v2018 = vpack.c.b16 %v1984, %v1983
    %v2019 = vpack.c.b16 %v1986, %v1985
    %v2020 = vpack.c.b16 %v1988, %v1987
    %2053 = vmatprep.subr.bf16.mxu0 0
    %2054 = vmatpush1.bf16.msra.mxu0 %v1996
    %2055 = vmatprep.subr.bf16.mxu0 0
    %2056 = vmatpush1.bf16.msra.mxu0 %v1995
    %2057 = vmatprep.subr.bf16.mxu0 0
    %2058 = vmatpush1.bf16.msra.mxu0 %v1994
    %2059 = vmatprep.subr.bf16.mxu0 0
    %2060 = vmatpush1.bf16.msra.mxu0 %v1993
    %2061 = vmatprep.subr.bf16.mxu0 0
    %2062 = vmatpush1.bf16.msra.mxu0 %v1992
    %2063 = vmatprep.subr.bf16.mxu0 0
    %2064 = vmatpush1.bf16.msra.mxu0 %v1991
    %2065 = vmatprep.subr.bf16.mxu0 0
    %2066 = vmatpush1.bf16.msra.mxu0 %v1990
    %2067 = vmatprep.subr.bf16.mxu0 0
    %2068 = vmatpush1.bf16.msra.mxu0 %v1989
    %2069 = vmatprep.subr.bf16.mxu0 0
    %2070 = vmatpush2.bf16.msra.mxu0 %v2004
    %2071 = vmatprep.subr.bf16.mxu0 0
    %2072 = vmatpush2.bf16.msra.mxu0 %v2003
    %2073 = vmatprep.subr.bf16.mxu0 0
    %2074 = vmatpush2.bf16.msra.mxu0 %v2002
    %2075 = vmatprep.subr.bf16.mxu0 0
    %2076 = vmatpush2.bf16.msra.mxu0 %v2001
    %2077 = vmatprep.subr.bf16.mxu0 0
    %2078 = vmatpush2.bf16.msra.mxu0 %v2000
    %2079 = vmatprep.subr.bf16.mxu0 0
    %2080 = vmatpush2.bf16.msra.mxu0 %v1999
    %2081 = vmatprep.subr.bf16.mxu0 0
    %2082 = vmatpush2.bf16.msra.mxu0 %v1998
    %2083 = vmatprep.subr.bf16.mxu0 0
    %2084 = vmatpush2.bf16.msra.mxu0 %v1997
    %2085 = vmatprep.mubr.bf16.mxu0 %v752
    %2086 = vmatmul.mubr.bf16.gmra.mxu0 %v751
    %v2087 = vpop.f32.mrf.mxu0
    %v2088 = vadd.f32 %v1859, %v2087
    %v2089 = vpop.f32.mrf.mxu0
    %v2090 = vpop.f32.mrf.mxu0
    %v2091 = vpop.f32.mrf.mxu0
    %2092 = vdwg.mxu0
    %2093 = vmatprep.subr.bf16.mxu0 0
    %2094 = vmatpush1.bf16.msra.mxu0 %v2012
    %2095 = vmatprep.subr.bf16.mxu0 0
    %2096 = vmatpush1.bf16.msra.mxu0 %v2011
    %2097 = vmatprep.subr.bf16.mxu0 0
    %2098 = vmatpush1.bf16.msra.mxu0 %v2010
    %2099 = vmatprep.subr.bf16.mxu0 0
    %2100 = vmatpush1.bf16.msra.mxu0 %v2009
    %2101 = vmatprep.subr.bf16.mxu0 0
    %2102 = vmatpush1.bf16.msra.mxu0 %v2008
    %2103 = vmatprep.subr.bf16.mxu0 0
    %2104 = vmatpush1.bf16.msra.mxu0 %v2007
    %2105 = vmatprep.subr.bf16.mxu0 0
    %2106 = vmatpush1.bf16.msra.mxu0 %v2006
    %2107 = vmatprep.subr.bf16.mxu0 0
    %2108 = vmatpush1.bf16.msra.mxu0 %v2005
    %2109 = vmatprep.subr.bf16.mxu0 0
    %2110 = vmatpush2.bf16.msra.mxu0 %v2020
    %2111 = vmatprep.subr.bf16.mxu0 0
    %2112 = vmatpush2.bf16.msra.mxu0 %v2019
    %2113 = vmatprep.subr.bf16.mxu0 0
    %2114 = vmatpush2.bf16.msra.mxu0 %v2018
    %2115 = vmatprep.subr.bf16.mxu0 0
    %2116 = vmatpush2.bf16.msra.mxu0 %v2017
    %2117 = vmatprep.subr.bf16.mxu0 0
    %2118 = vmatpush2.bf16.msra.mxu0 %v2016
    %2119 = vmatprep.subr.bf16.mxu0 0
    %2120 = vmatpush2.bf16.msra.mxu0 %v2015
    %2121 = vmatprep.subr.bf16.mxu0 0
    %2122 = vmatpush2.bf16.msra.mxu0 %v2014
    %2123 = vmatprep.subr.bf16.mxu0 0
    %2124 = vmatpush2.bf16.msra.mxu0 %v2013
    %2125 = vmatprep.mubr.bf16.mxu0 %v754
    %2126 = vmatmul.mubr.bf16.gmra.mxu0 %v753
    %v2127 = vpop.f32.mrf.mxu0
    %v2128 = vadd.f32 %v2088, %v2127
    %v2129 = vpop.f32.mrf.mxu0
    %v2130 = vpop.f32.mrf.mxu0
    %v2131 = vpop.f32.mrf.mxu0
    %2132 = vdwg.mxu0
    %v2133 = vtanh.pop %v2128
    %2134 = vst [vmem:[#allocation11 + $0x18] sm:$0xff] %v2133
    %v2135 = vld [vmem:[#allocation10 + $0x10] sm:$0xf]
    %v2136 = vld [vmem:[#allocation10 + $0x2c] sm:$0xf]
    %v2137 = vld [vmem:[#allocation10 + $0x48] sm:$0xf]
    %v2138 = vld [vmem:[#allocation10 + $0x64] sm:$0xf]
    %v2139 = vld [vmem:[#allocation10 + $0x80] sm:$0xf]
    %v2140 = vld [vmem:[#allocation10 + $0x9c] sm:$0xf]
    %v2141 = vld [vmem:[#allocation10 + $0xb8] sm:$0xf]
    %v2142 = vld [vmem:[#allocation10 + $0xd4] sm:$0xf]
    %v2143 = vld [vmem:[#allocation10 + $0xf0] sm:$0xf]
    %v2144 = vld [vmem:[#allocation10 + $0x10c] sm:$0xf]
    %v2145 = vld [vmem:[#allocation10 + $0x128] sm:$0xf]
    %v2146 = vld [vmem:[#allocation10 + $0x144] sm:$0xf]
    %v2147 = vld [vmem:[#allocation10 + $0x160] sm:$0xf]
    %v2148 = vld [vmem:[#allocation10 + $0x17c] sm:$0xf]
    %v2149 = vld [vmem:[#allocation10 + $0x198] sm:$0xf]
    %v2150 = vld [vmem:[#allocation10 + $0x1b4] sm:$0xf]
    %v2151 = vld [vmem:[#allocation10 + $0x1d0] sm:$0xf]
    %v2152 = vld [vmem:[#allocation10 + $0x1ec] sm:$0xf]
    %v2153 = vld [vmem:[#allocation10 + $0x208] sm:$0xf]
    %v2154 = vld [vmem:[#allocation10 + $0x224] sm:$0xf]
    %v2155 = vld [vmem:[#allocation10 + $0x240] sm:$0xf]
    %v2156 = vld [vmem:[#allocation10 + $0x25c] sm:$0xf]
    %v2157 = vld [vmem:[#allocation10 + $0x278] sm:$0xf]
    %v2158 = vld [vmem:[#allocation10 + $0x294] sm:$0xf]
    %v2159 = vld [vmem:[#allocation10 + $0x2b0] sm:$0xf]
    %v2160 = vld [vmem:[#allocation10 + $0x2cc] sm:$0xf]
    %v2161 = vld [vmem:[#allocation10 + $0x2e8] sm:$0xf]
    %v2162 = vld [vmem:[#allocation10 + $0x304] sm:$0xf]
    %v2163 = vld [vmem:[#allocation10 + $0x320] sm:$0xf]
    %v2164 = vld [vmem:[#allocation10 + $0x33c] sm:$0xf]
    %v2165 = vld [vmem:[#allocation10 + $0x358] sm:$0xf]
    %v2166 = vld [vmem:[#allocation10 + $0x374] sm:$0xf]
    %v2167 = vld [vmem:[#allocation10 + $0x390] sm:$0xf]
    %v2168 = vld [vmem:[#allocation10 + $0x3ac] sm:$0xf]
    %v2169 = vld [vmem:[#allocation10 + $0x3c8] sm:$0xf]
    %v2170 = vld [vmem:[#allocation10 + $0x3e4] sm:$0xf]
    %v2171 = vld [vmem:[#allocation10 + $0x400] sm:$0xf]
    %v2172 = vld [vmem:[#allocation10 + $0x41c] sm:$0xf]
    %v2173 = vld [vmem:[#allocation10 + $0x438] sm:$0xf]
    %v2174 = vld [vmem:[#allocation10 + $0x454] sm:$0xf]
    %v2175 = vld [vmem:[#allocation10 + $0x470] sm:$0xf]
    %v2176 = vld [vmem:[#allocation10 + $0x48c] sm:$0xf]
    %v2177 = vld [vmem:[#allocation10 + $0x4a8] sm:$0xf]
    %v2178 = vld [vmem:[#allocation10 + $0x4c4] sm:$0xf]
    %v2179 = vld [vmem:[#allocation10 + $0x4e0] sm:$0xf]
    %v2180 = vld [vmem:[#allocation10 + $0x4fc] sm:$0xf]
    %v2181 = vld [vmem:[#allocation10 + $0x518] sm:$0xf]
    %v2182 = vld [vmem:[#allocation10 + $0x534] sm:$0xf]
    %v2183 = vld [vmem:[#allocation10 + $0x550] sm:$0xf]
    %v2184 = vld [vmem:[#allocation10 + $0x56c] sm:$0xf]
    %v2185 = vld [vmem:[#allocation10 + $0x588] sm:$0xf]
    %v2186 = vld [vmem:[#allocation10 + $0x5a4] sm:$0xf]
    %v2187 = vld [vmem:[#allocation10 + $0x5c0] sm:$0xf]
    %v2188 = vld [vmem:[#allocation10 + $0x5dc] sm:$0xf]
    %v2189 = vld [vmem:[#allocation10 + $0x5f8] sm:$0xf]
    %v2190 = vld [vmem:[#allocation10 + $0x614] sm:$0xf]
    %v2191 = vld [vmem:[#allocation10 + $0x630] sm:$0xf]
    %v2192 = vld [vmem:[#allocation10 + $0x64c] sm:$0xf]
    %v2193 = vld [vmem:[#allocation10 + $0x668] sm:$0xf]
    %v2194 = vld [vmem:[#allocation10 + $0x684] sm:$0xf]
    %v2195 = vld [vmem:[#allocation10 + $0x6a0] sm:$0xf]
    %v2196 = vld [vmem:[#allocation10 + $0x6bc] sm:$0xf]
    %v2197 = vld [vmem:[#allocation10 + $0x6d8] sm:$0xf]
    %v2198 = vld [vmem:[#allocation10 + $0x6f4] sm:$0xf]
    %v2199 = vld [vmem:[%s6 + $0x4] sm:$0x1]
    %v2201 = vlaneseq
    %v2202 = vshrl.u32 %v2201, 7
    %v2203 = vsub.s32 0, %v2202
    %v2204 = vrot.slane %v2199, %v2203
    %v2270 = vunpack.c.l.b16 %v2135
    %v2271 = vunpack.c.l.b16 %v2136
    %v2272 = vunpack.c.l.b16 %v2137
    %v2273 = vunpack.c.l.b16 %v2138
    %v2274 = vunpack.c.l.b16 %v2139
    %v2275 = vunpack.c.l.b16 %v2140
    %v2276 = vunpack.c.l.b16 %v2141
    %v2277 = vunpack.c.l.b16 %v2142
    %v2278 = vunpack.c.l.b16 %v2143
    %v2279 = vunpack.c.l.b16 %v2144
    %v2280 = vunpack.c.l.b16 %v2145
    %v2281 = vunpack.c.l.b16 %v2146
    %v2282 = vunpack.c.l.b16 %v2147
    %v2283 = vunpack.c.l.b16 %v2148
    %v2284 = vunpack.c.l.b16 %v2149
    %v2285 = vunpack.c.l.b16 %v2150
    %v2286 = vunpack.c.l.b16 %v2151
    %v2287 = vunpack.c.l.b16 %v2152
    %v2288 = vunpack.c.l.b16 %v2153
    %v2289 = vunpack.c.l.b16 %v2154
    %v2290 = vunpack.c.l.b16 %v2155
    %v2291 = vunpack.c.l.b16 %v2156
    %v2292 = vunpack.c.l.b16 %v2157
    %v2293 = vunpack.c.l.b16 %v2158
    %v2294 = vunpack.c.l.b16 %v2159
    %v2295 = vunpack.c.l.b16 %v2160
    %v2296 = vunpack.c.l.b16 %v2161
    %v2297 = vunpack.c.l.b16 %v2162
    %v2298 = vunpack.c.l.b16 %v2163
    %v2299 = vunpack.c.l.b16 %v2164
    %v2300 = vunpack.c.l.b16 %v2165
    %v2301 = vunpack.c.l.b16 %v2166
    %v2302 = vunpack.c.l.b16 %v2167
    %v2303 = vunpack.c.l.b16 %v2168
    %v2304 = vunpack.c.l.b16 %v2169
    %v2305 = vunpack.c.l.b16 %v2170
    %v2306 = vunpack.c.l.b16 %v2171
    %v2307 = vunpack.c.l.b16 %v2172
    %v2308 = vunpack.c.l.b16 %v2173
    %v2309 = vunpack.c.l.b16 %v2174
    %v2310 = vunpack.c.l.b16 %v2175
    %v2311 = vunpack.c.l.b16 %v2176
    %v2312 = vunpack.c.l.b16 %v2177
    %v2313 = vunpack.c.l.b16 %v2178
    %v2314 = vunpack.c.l.b16 %v2179
    %v2315 = vunpack.c.l.b16 %v2180
    %v2316 = vunpack.c.l.b16 %v2181
    %v2317 = vunpack.c.l.b16 %v2182
    %v2318 = vunpack.c.l.b16 %v2183
    %v2319 = vunpack.c.l.b16 %v2184
    %v2320 = vunpack.c.l.b16 %v2185
    %v2321 = vunpack.c.l.b16 %v2186
    %v2322 = vunpack.c.l.b16 %v2187
    %v2323 = vunpack.c.l.b16 %v2188
    %v2324 = vunpack.c.l.b16 %v2189
    %v2325 = vunpack.c.l.b16 %v2190
    %v2326 = vunpack.c.l.b16 %v2191
    %v2327 = vunpack.c.l.b16 %v2192
    %v2328 = vunpack.c.l.b16 %v2193
    %v2329 = vunpack.c.l.b16 %v2194
    %v2330 = vunpack.c.l.b16 %v2195
    %v2331 = vunpack.c.l.b16 %v2196
    %v2332 = vunpack.c.l.b16 %v2197
    %v2333 = vunpack.c.l.b16 %v2198
    %v2334 = vpack.c.b16 %v2271, %v2270
    %v2335 = vpack.c.b16 %v2273, %v2272
    %v2336 = vpack.c.b16 %v2275, %v2274
    %v2337 = vpack.c.b16 %v2277, %v2276
    %v2338 = vpack.c.b16 %v2279, %v2278
    %v2339 = vpack.c.b16 %v2281, %v2280
    %v2340 = vpack.c.b16 %v2283, %v2282
    %v2341 = vpack.c.b16 %v2285, %v2284
    %v2342 = vpack.c.b16 %v2287, %v2286
    %v2343 = vpack.c.b16 %v2289, %v2288
    %v2344 = vpack.c.b16 %v2291, %v2290
    %v2345 = vpack.c.b16 %v2293, %v2292
    %v2346 = vpack.c.b16 %v2295, %v2294
    %v2347 = vpack.c.b16 %v2297, %v2296
    %v2348 = vpack.c.b16 %v2299, %v2298
    %v2349 = vpack.c.b16 %v2301, %v2300
    %v2350 = vpack.c.b16 %v2303, %v2302
    %v2351 = vpack.c.b16 %v2305, %v2304
    %v2352 = vpack.c.b16 %v2307, %v2306
    %v2353 = vpack.c.b16 %v2309, %v2308
    %v2354 = vpack.c.b16 %v2311, %v2310
    %v2355 = vpack.c.b16 %v2313, %v2312
    %v2356 = vpack.c.b16 %v2315, %v2314
    %v2357 = vpack.c.b16 %v2317, %v2316
    %v2358 = vpack.c.b16 %v2319, %v2318
    %v2359 = vpack.c.b16 %v2321, %v2320
    %v2360 = vpack.c.b16 %v2323, %v2322
    %v2361 = vpack.c.b16 %v2325, %v2324
    %v2362 = vpack.c.b16 %v2327, %v2326
    %v2363 = vpack.c.b16 %v2329, %v2328
    %v2364 = vpack.c.b16 %v2331, %v2330
    %v2365 = vpack.c.b16 %v2333, %v2332
    %2398 = vmatprep.subr.bf16.mxu0 0
    %2399 = vmatpush1.bf16.msra.mxu0 %v2341
    %2400 = vmatprep.subr.bf16.mxu0 0
    %2401 = vmatpush1.bf16.msra.mxu0 %v2340
    %2402 = vmatprep.subr.bf16.mxu0 0
    %2403 = vmatpush1.bf16.msra.mxu0 %v2339
    %2404 = vmatprep.subr.bf16.mxu0 0
    %2405 = vmatpush1.bf16.msra.mxu0 %v2338
    %2406 = vmatprep.subr.bf16.mxu0 0
    %2407 = vmatpush1.bf16.msra.mxu0 %v2337
    %2408 = vmatprep.subr.bf16.mxu0 0
    %2409 = vmatpush1.bf16.msra.mxu0 %v2336
    %2410 = vmatprep.subr.bf16.mxu0 0
    %2411 = vmatpush1.bf16.msra.mxu0 %v2335
    %2412 = vmatprep.subr.bf16.mxu0 0
    %2413 = vmatpush1.bf16.msra.mxu0 %v2334
    %2414 = vmatprep.subr.bf16.mxu0 0
    %2415 = vmatpush2.bf16.msra.mxu0 %v2349
    %2416 = vmatprep.subr.bf16.mxu0 0
    %2417 = vmatpush2.bf16.msra.mxu0 %v2348
    %2418 = vmatprep.subr.bf16.mxu0 0
    %2419 = vmatpush2.bf16.msra.mxu0 %v2347
    %2420 = vmatprep.subr.bf16.mxu0 0
    %2421 = vmatpush2.bf16.msra.mxu0 %v2346
    %2422 = vmatprep.subr.bf16.mxu0 0
    %2423 = vmatpush2.bf16.msra.mxu0 %v2345
    %2424 = vmatprep.subr.bf16.mxu0 0
    %2425 = vmatpush2.bf16.msra.mxu0 %v2344
    %2426 = vmatprep.subr.bf16.mxu0 0
    %2427 = vmatpush2.bf16.msra.mxu0 %v2343
    %2428 = vmatprep.subr.bf16.mxu0 0
    %2429 = vmatpush2.bf16.msra.mxu0 %v2342
    %2430 = vmatprep.mubr.bf16.mxu0 %v752
    %2431 = vmatmul.mubr.bf16.gmra.mxu0 %v751
    %v2432 = vpop.f32.mrf.mxu0
    %v2433 = vadd.f32 %v2204, %v2432
    %v2434 = vpop.f32.mrf.mxu0
    %v2435 = vpop.f32.mrf.mxu0
    %v2436 = vpop.f32.mrf.mxu0
    %2437 = vdwg.mxu0
    %2438 = vmatprep.subr.bf16.mxu0 0
    %2439 = vmatpush1.bf16.msra.mxu0 %v2357
    %2440 = vmatprep.subr.bf16.mxu0 0
    %2441 = vmatpush1.bf16.msra.mxu0 %v2356
    %2442 = vmatprep.subr.bf16.mxu0 0
    %2443 = vmatpush1.bf16.msra.mxu0 %v2355
    %2444 = vmatprep.subr.bf16.mxu0 0
    %2445 = vmatpush1.bf16.msra.mxu0 %v2354
    %2446 = vmatprep.subr.bf16.mxu0 0
    %2447 = vmatpush1.bf16.msra.mxu0 %v2353
    %2448 = vmatprep.subr.bf16.mxu0 0
    %2449 = vmatpush1.bf16.msra.mxu0 %v2352
    %2450 = vmatprep.subr.bf16.mxu0 0
    %2451 = vmatpush1.bf16.msra.mxu0 %v2351
    %2452 = vmatprep.subr.bf16.mxu0 0
    %2453 = vmatpush1.bf16.msra.mxu0 %v2350
    %2454 = vmatprep.subr.bf16.mxu0 0
    %2455 = vmatpush2.bf16.msra.mxu0 %v2365
    %2456 = vmatprep.subr.bf16.mxu0 0
    %2457 = vmatpush2.bf16.msra.mxu0 %v2364
    %2458 = vmatprep.subr.bf16.mxu0 0
    %2459 = vmatpush2.bf16.msra.mxu0 %v2363
    %2460 = vmatprep.subr.bf16.mxu0 0
    %2461 = vmatpush2.bf16.msra.mxu0 %v2362
    %2462 = vmatprep.subr.bf16.mxu0 0
    %2463 = vmatpush2.bf16.msra.mxu0 %v2361
    %2464 = vmatprep.subr.bf16.mxu0 0
    %2465 = vmatpush2.bf16.msra.mxu0 %v2360
    %2466 = vmatprep.subr.bf16.mxu0 0
    %2467 = vmatpush2.bf16.msra.mxu0 %v2359
    %2468 = vmatprep.subr.bf16.mxu0 0
    %2469 = vmatpush2.bf16.msra.mxu0 %v2358
    %2470 = vmatprep.mubr.bf16.mxu0 %v754
    %2471 = vmatmul.mubr.bf16.gmra.mxu0 %v753
    %v2472 = vpop.f32.mrf.mxu0
    %v2473 = vadd.f32 %v2433, %v2472
    %v2474 = vpop.f32.mrf.mxu0
    %v2475 = vpop.f32.mrf.mxu0
    %v2476 = vpop.f32.mrf.mxu0
    %2477 = vdwg.mxu0
    %v2478 = vtanh.pop %v2473
    %2479 = vst [vmem:[#allocation11 + $0x20] sm:$0xff] %v2478
    %v2480 = vld [vmem:[#allocation10 + $0x14] sm:$0xf]
    %v2481 = vld [vmem:[#allocation10 + $0x30] sm:$0xf]
    %v2482 = vld [vmem:[#allocation10 + $0x4c] sm:$0xf]
    %v2483 = vld [vmem:[#allocation10 + $0x68] sm:$0xf]
    %v2484 = vld [vmem:[#allocation10 + $0x84] sm:$0xf]
    %v2485 = vld [vmem:[#allocation10 + $0xa0] sm:$0xf]
    %v2486 = vld [vmem:[#allocation10 + $0xbc] sm:$0xf]
    %v2487 = vld [vmem:[#allocation10 + $0xd8] sm:$0xf]
    %v2488 = vld [vmem:[#allocation10 + $0xf4] sm:$0xf]
    %v2489 = vld [vmem:[#allocation10 + $0x110] sm:$0xf]
    %v2490 = vld [vmem:[#allocation10 + $0x12c] sm:$0xf]
    %v2491 = vld [vmem:[#allocation10 + $0x148] sm:$0xf]
    %v2492 = vld [vmem:[#allocation10 + $0x164] sm:$0xf]
    %v2493 = vld [vmem:[#allocation10 + $0x180] sm:$0xf]
    %v2494 = vld [vmem:[#allocation10 + $0x19c] sm:$0xf]
    %v2495 = vld [vmem:[#allocation10 + $0x1b8] sm:$0xf]
    %v2496 = vld [vmem:[#allocation10 + $0x1d4] sm:$0xf]
    %v2497 = vld [vmem:[#allocation10 + $0x1f0] sm:$0xf]
    %v2498 = vld [vmem:[#allocation10 + $0x20c] sm:$0xf]
    %v2499 = vld [vmem:[#allocation10 + $0x228] sm:$0xf]
    %v2500 = vld [vmem:[#allocation10 + $0x244] sm:$0xf]
    %v2501 = vld [vmem:[#allocation10 + $0x260] sm:$0xf]
    %v2502 = vld [vmem:[#allocation10 + $0x27c] sm:$0xf]
    %v2503 = vld [vmem:[#allocation10 + $0x298] sm:$0xf]
    %v2504 = vld [vmem:[#allocation10 + $0x2b4] sm:$0xf]
    %v2505 = vld [vmem:[#allocation10 + $0x2d0] sm:$0xf]
    %v2506 = vld [vmem:[#allocation10 + $0x2ec] sm:$0xf]
    %v2507 = vld [vmem:[#allocation10 + $0x308] sm:$0xf]
    %v2508 = vld [vmem:[#allocation10 + $0x324] sm:$0xf]
    %v2509 = vld [vmem:[#allocation10 + $0x340] sm:$0xf]
    %v2510 = vld [vmem:[#allocation10 + $0x35c] sm:$0xf]
    %v2511 = vld [vmem:[#allocation10 + $0x378] sm:$0xf]
    %v2512 = vld [vmem:[#allocation10 + $0x394] sm:$0xf]
    %v2513 = vld [vmem:[#allocation10 + $0x3b0] sm:$0xf]
    %v2514 = vld [vmem:[#allocation10 + $0x3cc] sm:$0xf]
    %v2515 = vld [vmem:[#allocation10 + $0x3e8] sm:$0xf]
    %v2516 = vld [vmem:[#allocation10 + $0x404] sm:$0xf]
    %v2517 = vld [vmem:[#allocation10 + $0x420] sm:$0xf]
    %v2518 = vld [vmem:[#allocation10 + $0x43c] sm:$0xf]
    %v2519 = vld [vmem:[#allocation10 + $0x458] sm:$0xf]
    %v2520 = vld [vmem:[#allocation10 + $0x474] sm:$0xf]
    %v2521 = vld [vmem:[#allocation10 + $0x490] sm:$0xf]
    %v2522 = vld [vmem:[#allocation10 + $0x4ac] sm:$0xf]
    %v2523 = vld [vmem:[#allocation10 + $0x4c8] sm:$0xf]
    %v2524 = vld [vmem:[#allocation10 + $0x4e4] sm:$0xf]
    %v2525 = vld [vmem:[#allocation10 + $0x500] sm:$0xf]
    %v2526 = vld [vmem:[#allocation10 + $0x51c] sm:$0xf]
    %v2527 = vld [vmem:[#allocation10 + $0x538] sm:$0xf]
    %v2528 = vld [vmem:[#allocation10 + $0x554] sm:$0xf]
    %v2529 = vld [vmem:[#allocation10 + $0x570] sm:$0xf]
    %v2530 = vld [vmem:[#allocation10 + $0x58c] sm:$0xf]
    %v2531 = vld [vmem:[#allocation10 + $0x5a8] sm:$0xf]
    %v2532 = vld [vmem:[#allocation10 + $0x5c4] sm:$0xf]
    %v2533 = vld [vmem:[#allocation10 + $0x5e0] sm:$0xf]
    %v2534 = vld [vmem:[#allocation10 + $0x5fc] sm:$0xf]
    %v2535 = vld [vmem:[#allocation10 + $0x618] sm:$0xf]
    %v2536 = vld [vmem:[#allocation10 + $0x634] sm:$0xf]
    %v2537 = vld [vmem:[#allocation10 + $0x650] sm:$0xf]
    %v2538 = vld [vmem:[#allocation10 + $0x66c] sm:$0xf]
    %v2539 = vld [vmem:[#allocation10 + $0x688] sm:$0xf]
    %v2540 = vld [vmem:[#allocation10 + $0x6a4] sm:$0xf]
    %v2541 = vld [vmem:[#allocation10 + $0x6c0] sm:$0xf]
    %v2542 = vld [vmem:[#allocation10 + $0x6dc] sm:$0xf]
    %v2543 = vld [vmem:[#allocation10 + $0x6f8] sm:$0xf]
    %v2544 = vld [vmem:[%s6 + $0x5] sm:$0x1]
    %v2546 = vlaneseq
    %v2547 = vshrl.u32 %v2546, 7
    %v2548 = vsub.s32 0, %v2547
    %v2549 = vrot.slane %v2544, %v2548
    %v2615 = vunpack.c.l.b16 %v2480
    %v2616 = vunpack.c.l.b16 %v2481
    %v2617 = vunpack.c.l.b16 %v2482
    %v2618 = vunpack.c.l.b16 %v2483
    %v2619 = vunpack.c.l.b16 %v2484
    %v2620 = vunpack.c.l.b16 %v2485
    %v2621 = vunpack.c.l.b16 %v2486
    %v2622 = vunpack.c.l.b16 %v2487
    %v2623 = vunpack.c.l.b16 %v2488
    %v2624 = vunpack.c.l.b16 %v2489
    %v2625 = vunpack.c.l.b16 %v2490
    %v2626 = vunpack.c.l.b16 %v2491
    %v2627 = vunpack.c.l.b16 %v2492
    %v2628 = vunpack.c.l.b16 %v2493
    %v2629 = vunpack.c.l.b16 %v2494
    %v2630 = vunpack.c.l.b16 %v2495
    %v2631 = vunpack.c.l.b16 %v2496
    %v2632 = vunpack.c.l.b16 %v2497
    %v2633 = vunpack.c.l.b16 %v2498
    %v2634 = vunpack.c.l.b16 %v2499
    %v2635 = vunpack.c.l.b16 %v2500
    %v2636 = vunpack.c.l.b16 %v2501
    %v2637 = vunpack.c.l.b16 %v2502
    %v2638 = vunpack.c.l.b16 %v2503
    %v2639 = vunpack.c.l.b16 %v2504
    %v2640 = vunpack.c.l.b16 %v2505
    %v2641 = vunpack.c.l.b16 %v2506
    %v2642 = vunpack.c.l.b16 %v2507
    %v2643 = vunpack.c.l.b16 %v2508
    %v2644 = vunpack.c.l.b16 %v2509
    %v2645 = vunpack.c.l.b16 %v2510
    %v2646 = vunpack.c.l.b16 %v2511
    %v2647 = vunpack.c.l.b16 %v2512
    %v2648 = vunpack.c.l.b16 %v2513
    %v2649 = vunpack.c.l.b16 %v2514
    %v2650 = vunpack.c.l.b16 %v2515
    %v2651 = vunpack.c.l.b16 %v2516
    %v2652 = vunpack.c.l.b16 %v2517
    %v2653 = vunpack.c.l.b16 %v2518
    %v2654 = vunpack.c.l.b16 %v2519
    %v2655 = vunpack.c.l.b16 %v2520
    %v2656 = vunpack.c.l.b16 %v2521
    %v2657 = vunpack.c.l.b16 %v2522
    %v2658 = vunpack.c.l.b16 %v2523
    %v2659 = vunpack.c.l.b16 %v2524
    %v2660 = vunpack.c.l.b16 %v2525
    %v2661 = vunpack.c.l.b16 %v2526
    %v2662 = vunpack.c.l.b16 %v2527
    %v2663 = vunpack.c.l.b16 %v2528
    %v2664 = vunpack.c.l.b16 %v2529
    %v2665 = vunpack.c.l.b16 %v2530
    %v2666 = vunpack.c.l.b16 %v2531
    %v2667 = vunpack.c.l.b16 %v2532
    %v2668 = vunpack.c.l.b16 %v2533
    %v2669 = vunpack.c.l.b16 %v2534
    %v2670 = vunpack.c.l.b16 %v2535
    %v2671 = vunpack.c.l.b16 %v2536
    %v2672 = vunpack.c.l.b16 %v2537
    %v2673 = vunpack.c.l.b16 %v2538
    %v2674 = vunpack.c.l.b16 %v2539
    %v2675 = vunpack.c.l.b16 %v2540
    %v2676 = vunpack.c.l.b16 %v2541
    %v2677 = vunpack.c.l.b16 %v2542
    %v2678 = vunpack.c.l.b16 %v2543
    %v2679 = vpack.c.b16 %v2616, %v2615
    %v2680 = vpack.c.b16 %v2618, %v2617
    %v2681 = vpack.c.b16 %v2620, %v2619
    %v2682 = vpack.c.b16 %v2622, %v2621
    %v2683 = vpack.c.b16 %v2624, %v2623
    %v2684 = vpack.c.b16 %v2626, %v2625
    %v2685 = vpack.c.b16 %v2628, %v2627
    %v2686 = vpack.c.b16 %v2630, %v2629
    %v2687 = vpack.c.b16 %v2632, %v2631
    %v2688 = vpack.c.b16 %v2634, %v2633
    %v2689 = vpack.c.b16 %v2636, %v2635
    %v2690 = vpack.c.b16 %v2638, %v2637
    %v2691 = vpack.c.b16 %v2640, %v2639
    %v2692 = vpack.c.b16 %v2642, %v2641
    %v2693 = vpack.c.b16 %v2644, %v2643
    %v2694 = vpack.c.b16 %v2646, %v2645
    %v2695 = vpack.c.b16 %v2648, %v2647
    %v2696 = vpack.c.b16 %v2650, %v2649
    %v2697 = vpack.c.b16 %v2652, %v2651
    %v2698 = vpack.c.b16 %v2654, %v2653
    %v2699 = vpack.c.b16 %v2656, %v2655
    %v2700 = vpack.c.b16 %v2658, %v2657
    %v2701 = vpack.c.b16 %v2660, %v2659
    %v2702 = vpack.c.b16 %v2662, %v2661
    %v2703 = vpack.c.b16 %v2664, %v2663
    %v2704 = vpack.c.b16 %v2666, %v2665
    %v2705 = vpack.c.b16 %v2668, %v2667
    %v2706 = vpack.c.b16 %v2670, %v2669
    %v2707 = vpack.c.b16 %v2672, %v2671
    %v2708 = vpack.c.b16 %v2674, %v2673
    %v2709 = vpack.c.b16 %v2676, %v2675
    %v2710 = vpack.c.b16 %v2678, %v2677
    %2743 = vmatprep.subr.bf16.mxu0 0
    %2744 = vmatpush1.bf16.msra.mxu0 %v2686
    %2745 = vmatprep.subr.bf16.mxu0 0
    %2746 = vmatpush1.bf16.msra.mxu0 %v2685
    %2747 = vmatprep.subr.bf16.mxu0 0
    %2748 = vmatpush1.bf16.msra.mxu0 %v2684
    %2749 = vmatprep.subr.bf16.mxu0 0
    %2750 = vmatpush1.bf16.msra.mxu0 %v2683
    %2751 = vmatprep.subr.bf16.mxu0 0
    %2752 = vmatpush1.bf16.msra.mxu0 %v2682
    %2753 = vmatprep.subr.bf16.mxu0 0
    %2754 = vmatpush1.bf16.msra.mxu0 %v2681
    %2755 = vmatprep.subr.bf16.mxu0 0
    %2756 = vmatpush1.bf16.msra.mxu0 %v2680
    %2757 = vmatprep.subr.bf16.mxu0 0
    %2758 = vmatpush1.bf16.msra.mxu0 %v2679
    %2759 = vmatprep.subr.bf16.mxu0 0
    %2760 = vmatpush2.bf16.msra.mxu0 %v2694
    %2761 = vmatprep.subr.bf16.mxu0 0
    %2762 = vmatpush2.bf16.msra.mxu0 %v2693
    %2763 = vmatprep.subr.bf16.mxu0 0
    %2764 = vmatpush2.bf16.msra.mxu0 %v2692
    %2765 = vmatprep.subr.bf16.mxu0 0
    %2766 = vmatpush2.bf16.msra.mxu0 %v2691
    %2767 = vmatprep.subr.bf16.mxu0 0
    %2768 = vmatpush2.bf16.msra.mxu0 %v2690
    %2769 = vmatprep.subr.bf16.mxu0 0
    %2770 = vmatpush2.bf16.msra.mxu0 %v2689
    %2771 = vmatprep.subr.bf16.mxu0 0
    %2772 = vmatpush2.bf16.msra.mxu0 %v2688
    %2773 = vmatprep.subr.bf16.mxu0 0
    %2774 = vmatpush2.bf16.msra.mxu0 %v2687
    %2775 = vmatprep.mubr.bf16.mxu0 %v752
    %2776 = vmatmul.mubr.bf16.gmra.mxu0 %v751
    %v2777 = vpop.f32.mrf.mxu0
    %v2778 = vadd.f32 %v2549, %v2777
    %v2779 = vpop.f32.mrf.mxu0
    %v2780 = vpop.f32.mrf.mxu0
    %v2781 = vpop.f32.mrf.mxu0
    %2782 = vdwg.mxu0
    %2783 = vmatprep.subr.bf16.mxu0 0
    %2784 = vmatpush1.bf16.msra.mxu0 %v2702
    %2785 = vmatprep.subr.bf16.mxu0 0
    %2786 = vmatpush1.bf16.msra.mxu0 %v2701
    %2787 = vmatprep.subr.bf16.mxu0 0
    %2788 = vmatpush1.bf16.msra.mxu0 %v2700
    %2789 = vmatprep.subr.bf16.mxu0 0
    %2790 = vmatpush1.bf16.msra.mxu0 %v2699
    %2791 = vmatprep.subr.bf16.mxu0 0
    %2792 = vmatpush1.bf16.msra.mxu0 %v2698
    %2793 = vmatprep.subr.bf16.mxu0 0
    %2794 = vmatpush1.bf16.msra.mxu0 %v2697
    %2795 = vmatprep.subr.bf16.mxu0 0
    %2796 = vmatpush1.bf16.msra.mxu0 %v2696
    %2797 = vmatprep.subr.bf16.mxu0 0
    %2798 = vmatpush1.bf16.msra.mxu0 %v2695
    %2799 = vmatprep.subr.bf16.mxu0 0
    %2800 = vmatpush2.bf16.msra.mxu0 %v2710
    %2801 = vmatprep.subr.bf16.mxu0 0
    %2802 = vmatpush2.bf16.msra.mxu0 %v2709
    %2803 = vmatprep.subr.bf16.mxu0 0
    %2804 = vmatpush2.bf16.msra.mxu0 %v2708
    %2805 = vmatprep.subr.bf16.mxu0 0
    %2806 = vmatpush2.bf16.msra.mxu0 %v2707
    %2807 = vmatprep.subr.bf16.mxu0 0
    %2808 = vmatpush2.bf16.msra.mxu0 %v2706
    %2809 = vmatprep.subr.bf16.mxu0 0
    %2810 = vmatpush2.bf16.msra.mxu0 %v2705
    %2811 = vmatprep.subr.bf16.mxu0 0
    %2812 = vmatpush2.bf16.msra.mxu0 %v2704
    %2813 = vmatprep.subr.bf16.mxu0 0
    %2814 = vmatpush2.bf16.msra.mxu0 %v2703
    %2815 = vmatprep.mubr.bf16.mxu0 %v754
    %2816 = vmatmul.mubr.bf16.gmra.mxu0 %v753
    %v2817 = vpop.f32.mrf.mxu0
    %v2818 = vadd.f32 %v2778, %v2817
    %v2819 = vpop.f32.mrf.mxu0
    %v2820 = vpop.f32.mrf.mxu0
    %v2821 = vpop.f32.mrf.mxu0
    %2822 = vdwg.mxu0
    %v2823 = vtanh.pop %v2818
    %2824 = vst [vmem:[#allocation11 + $0x28] sm:$0xff] %v2823
    %v2825 = vld [vmem:[#allocation10 + $0x18] sm:$0xf]
    %v2826 = vld [vmem:[#allocation10 + $0x34] sm:$0xf]
    %v2827 = vld [vmem:[#allocation10 + $0x50] sm:$0xf]
    %v2828 = vld [vmem:[#allocation10 + $0x6c] sm:$0xf]
    %v2829 = vld [vmem:[#allocation10 + $0x88] sm:$0xf]
    %v2830 = vld [vmem:[#allocation10 + $0xa4] sm:$0xf]
    %v2831 = vld [vmem:[#allocation10 + $0xc0] sm:$0xf]
    %v2832 = vld [vmem:[#allocation10 + $0xdc] sm:$0xf]
    %v2833 = vld [vmem:[#allocation10 + $0xf8] sm:$0xf]
    %v2834 = vld [vmem:[#allocation10 + $0x114] sm:$0xf]
    %v2835 = vld [vmem:[#allocation10 + $0x130] sm:$0xf]
    %v2836 = vld [vmem:[#allocation10 + $0x14c] sm:$0xf]
    %v2837 = vld [vmem:[#allocation10 + $0x168] sm:$0xf]
    %v2838 = vld [vmem:[#allocation10 + $0x184] sm:$0xf]
    %v2839 = vld [vmem:[#allocation10 + $0x1a0] sm:$0xf]
    %v2840 = vld [vmem:[#allocation10 + $0x1bc] sm:$0xf]
    %v2841 = vld [vmem:[#allocation10 + $0x1d8] sm:$0xf]
    %v2842 = vld [vmem:[#allocation10 + $0x1f4] sm:$0xf]
    %v2843 = vld [vmem:[#allocation10 + $0x210] sm:$0xf]
    %v2844 = vld [vmem:[#allocation10 + $0x22c] sm:$0xf]
    %v2845 = vld [vmem:[#allocation10 + $0x248] sm:$0xf]
    %v2846 = vld [vmem:[#allocation10 + $0x264] sm:$0xf]
    %v2847 = vld [vmem:[#allocation10 + $0x280] sm:$0xf]
    %v2848 = vld [vmem:[#allocation10 + $0x29c] sm:$0xf]
    %v2849 = vld [vmem:[#allocation10 + $0x2b8] sm:$0xf]
    %v2850 = vld [vmem:[#allocation10 + $0x2d4] sm:$0xf]
    %v2851 = vld [vmem:[#allocation10 + $0x2f0] sm:$0xf]
    %v2852 = vld [vmem:[#allocation10 + $0x30c] sm:$0xf]
    %v2853 = vld [vmem:[#allocation10 + $0x328] sm:$0xf]
    %v2854 = vld [vmem:[#allocation10 + $0x344] sm:$0xf]
    %v2855 = vld [vmem:[#allocation10 + $0x360] sm:$0xf]
    %v2856 = vld [vmem:[#allocation10 + $0x37c] sm:$0xf]
    %v2857 = vld [vmem:[#allocation10 + $0x398] sm:$0xf]
    %v2858 = vld [vmem:[#allocation10 + $0x3b4] sm:$0xf]
    %v2859 = vld [vmem:[#allocation10 + $0x3d0] sm:$0xf]
    %v2860 = vld [vmem:[#allocation10 + $0x3ec] sm:$0xf]
    %v2861 = vld [vmem:[#allocation10 + $0x408] sm:$0xf]
    %v2862 = vld [vmem:[#allocation10 + $0x424] sm:$0xf]
    %v2863 = vld [vmem:[#allocation10 + $0x440] sm:$0xf]
    %v2864 = vld [vmem:[#allocation10 + $0x45c] sm:$0xf]
    %v2865 = vld [vmem:[#allocation10 + $0x478] sm:$0xf]
    %v2866 = vld [vmem:[#allocation10 + $0x494] sm:$0xf]
    %v2867 = vld [vmem:[#allocation10 + $0x4b0] sm:$0xf]
    %v2868 = vld [vmem:[#allocation10 + $0x4cc] sm:$0xf]
    %v2869 = vld [vmem:[#allocation10 + $0x4e8] sm:$0xf]
    %v2870 = vld [vmem:[#allocation10 + $0x504] sm:$0xf]
    %v2871 = vld [vmem:[#allocation10 + $0x520] sm:$0xf]
    %v2872 = vld [vmem:[#allocation10 + $0x53c] sm:$0xf]
    %v2873 = vld [vmem:[#allocation10 + $0x558] sm:$0xf]
    %v2874 = vld [vmem:[#allocation10 + $0x574] sm:$0xf]
    %v2875 = vld [vmem:[#allocation10 + $0x590] sm:$0xf]
    %v2876 = vld [vmem:[#allocation10 + $0x5ac] sm:$0xf]
    %v2877 = vld [vmem:[#allocation10 + $0x5c8] sm:$0xf]
    %v2878 = vld [vmem:[#allocation10 + $0x5e4] sm:$0xf]
    %v2879 = vld [vmem:[#allocation10 + $0x600] sm:$0xf]
    %v2880 = vld [vmem:[#allocation10 + $0x61c] sm:$0xf]
    %v2881 = vld [vmem:[#allocation10 + $0x638] sm:$0xf]
    %v2882 = vld [vmem:[#allocation10 + $0x654] sm:$0xf]
    %v2883 = vld [vmem:[#allocation10 + $0x670] sm:$0xf]
    %v2884 = vld [vmem:[#allocation10 + $0x68c] sm:$0xf]
    %v2885 = vld [vmem:[#allocation10 + $0x6a8] sm:$0xf]
    %v2886 = vld [vmem:[#allocation10 + $0x6c4] sm:$0xf]
    %v2887 = vld [vmem:[#allocation10 + $0x6e0] sm:$0xf]
    %v2888 = vld [vmem:[#allocation10 + $0x6fc] sm:$0xf]
    %v2889 = vld [vmem:[%s6 + $0x6] sm:$0x1]
    %v2891 = vlaneseq
    %v2892 = vshrl.u32 %v2891, 7
    %v2893 = vsub.s32 0, %v2892
    %v2894 = vrot.slane %v2889, %v2893
    %v2960 = vunpack.c.l.b16 %v2825
    %v2961 = vunpack.c.l.b16 %v2826
    %v2962 = vunpack.c.l.b16 %v2827
    %v2963 = vunpack.c.l.b16 %v2828
    %v2964 = vunpack.c.l.b16 %v2829
    %v2965 = vunpack.c.l.b16 %v2830
    %v2966 = vunpack.c.l.b16 %v2831
    %v2967 = vunpack.c.l.b16 %v2832
    %v2968 = vunpack.c.l.b16 %v2833
    %v2969 = vunpack.c.l.b16 %v2834
    %v2970 = vunpack.c.l.b16 %v2835
    %v2971 = vunpack.c.l.b16 %v2836
    %v2972 = vunpack.c.l.b16 %v2837
    %v2973 = vunpack.c.l.b16 %v2838
    %v2974 = vunpack.c.l.b16 %v2839
    %v2975 = vunpack.c.l.b16 %v2840
    %v2976 = vunpack.c.l.b16 %v2841
    %v2977 = vunpack.c.l.b16 %v2842
    %v2978 = vunpack.c.l.b16 %v2843
    %v2979 = vunpack.c.l.b16 %v2844
    %v2980 = vunpack.c.l.b16 %v2845
    %v2981 = vunpack.c.l.b16 %v2846
    %v2982 = vunpack.c.l.b16 %v2847
    %v2983 = vunpack.c.l.b16 %v2848
    %v2984 = vunpack.c.l.b16 %v2849
    %v2985 = vunpack.c.l.b16 %v2850
    %v2986 = vunpack.c.l.b16 %v2851
    %v2987 = vunpack.c.l.b16 %v2852
    %v2988 = vunpack.c.l.b16 %v2853
    %v2989 = vunpack.c.l.b16 %v2854
    %v2990 = vunpack.c.l.b16 %v2855
    %v2991 = vunpack.c.l.b16 %v2856
    %v2992 = vunpack.c.l.b16 %v2857
    %v2993 = vunpack.c.l.b16 %v2858
    %v2994 = vunpack.c.l.b16 %v2859
    %v2995 = vunpack.c.l.b16 %v2860
    %v2996 = vunpack.c.l.b16 %v2861
    %v2997 = vunpack.c.l.b16 %v2862
    %v2998 = vunpack.c.l.b16 %v2863
    %v2999 = vunpack.c.l.b16 %v2864
    %v3000 = vunpack.c.l.b16 %v2865
    %v3001 = vunpack.c.l.b16 %v2866
    %v3002 = vunpack.c.l.b16 %v2867
    %v3003 = vunpack.c.l.b16 %v2868
    %v3004 = vunpack.c.l.b16 %v2869
    %v3005 = vunpack.c.l.b16 %v2870
    %v3006 = vunpack.c.l.b16 %v2871
    %v3007 = vunpack.c.l.b16 %v2872
    %v3008 = vunpack.c.l.b16 %v2873
    %v3009 = vunpack.c.l.b16 %v2874
    %v3010 = vunpack.c.l.b16 %v2875
    %v3011 = vunpack.c.l.b16 %v2876
    %v3012 = vunpack.c.l.b16 %v2877
    %v3013 = vunpack.c.l.b16 %v2878
    %v3014 = vunpack.c.l.b16 %v2879
    %v3015 = vunpack.c.l.b16 %v2880
    %v3016 = vunpack.c.l.b16 %v2881
    %v3017 = vunpack.c.l.b16 %v2882
    %v3018 = vunpack.c.l.b16 %v2883
    %v3019 = vunpack.c.l.b16 %v2884
    %v3020 = vunpack.c.l.b16 %v2885
    %v3021 = vunpack.c.l.b16 %v2886
    %v3022 = vunpack.c.l.b16 %v2887
    %v3023 = vunpack.c.l.b16 %v2888
    %v3024 = vpack.c.b16 %v2961, %v2960
    %v3025 = vpack.c.b16 %v2963, %v2962
    %v3026 = vpack.c.b16 %v2965, %v2964
    %v3027 = vpack.c.b16 %v2967, %v2966
    %v3028 = vpack.c.b16 %v2969, %v2968
    %v3029 = vpack.c.b16 %v2971, %v2970
    %v3030 = vpack.c.b16 %v2973, %v2972
    %v3031 = vpack.c.b16 %v2975, %v2974
    %v3032 = vpack.c.b16 %v2977, %v2976
    %v3033 = vpack.c.b16 %v2979, %v2978
    %v3034 = vpack.c.b16 %v2981, %v2980
    %v3035 = vpack.c.b16 %v2983, %v2982
    %v3036 = vpack.c.b16 %v2985, %v2984
    %v3037 = vpack.c.b16 %v2987, %v2986
    %v3038 = vpack.c.b16 %v2989, %v2988
    %v3039 = vpack.c.b16 %v2991, %v2990
    %v3040 = vpack.c.b16 %v2993, %v2992
    %v3041 = vpack.c.b16 %v2995, %v2994
    %v3042 = vpack.c.b16 %v2997, %v2996
    %v3043 = vpack.c.b16 %v2999, %v2998
    %v3044 = vpack.c.b16 %v3001, %v3000
    %v3045 = vpack.c.b16 %v3003, %v3002
    %v3046 = vpack.c.b16 %v3005, %v3004
    %v3047 = vpack.c.b16 %v3007, %v3006
    %v3048 = vpack.c.b16 %v3009, %v3008
    %v3049 = vpack.c.b16 %v3011, %v3010
    %v3050 = vpack.c.b16 %v3013, %v3012
    %v3051 = vpack.c.b16 %v3015, %v3014
    %v3052 = vpack.c.b16 %v3017, %v3016
    %v3053 = vpack.c.b16 %v3019, %v3018
    %v3054 = vpack.c.b16 %v3021, %v3020
    %v3055 = vpack.c.b16 %v3023, %v3022
    %3088 = vmatprep.subr.bf16.mxu0 0
    %3089 = vmatpush1.bf16.msra.mxu0 %v3031
    %3090 = vmatprep.subr.bf16.mxu0 0
    %3091 = vmatpush1.bf16.msra.mxu0 %v3030
    %3092 = vmatprep.subr.bf16.mxu0 0
    %3093 = vmatpush1.bf16.msra.mxu0 %v3029
    %3094 = vmatprep.subr.bf16.mxu0 0
    %3095 = vmatpush1.bf16.msra.mxu0 %v3028
    %3096 = vmatprep.subr.bf16.mxu0 0
    %3097 = vmatpush1.bf16.msra.mxu0 %v3027
    %3098 = vmatprep.subr.bf16.mxu0 0
    %3099 = vmatpush1.bf16.msra.mxu0 %v3026
    %3100 = vmatprep.subr.bf16.mxu0 0
    %3101 = vmatpush1.bf16.msra.mxu0 %v3025
    %3102 = vmatprep.subr.bf16.mxu0 0
    %3103 = vmatpush1.bf16.msra.mxu0 %v3024
    %3104 = vmatprep.subr.bf16.mxu0 0
    %3105 = vmatpush2.bf16.msra.mxu0 %v3039
    %3106 = vmatprep.subr.bf16.mxu0 0
    %3107 = vmatpush2.bf16.msra.mxu0 %v3038
    %3108 = vmatprep.subr.bf16.mxu0 0
    %3109 = vmatpush2.bf16.msra.mxu0 %v3037
    %3110 = vmatprep.subr.bf16.mxu0 0
    %3111 = vmatpush2.bf16.msra.mxu0 %v3036
    %3112 = vmatprep.subr.bf16.mxu0 0
    %3113 = vmatpush2.bf16.msra.mxu0 %v3035
    %3114 = vmatprep.subr.bf16.mxu0 0
    %3115 = vmatpush2.bf16.msra.mxu0 %v3034
    %3116 = vmatprep.subr.bf16.mxu0 0
    %3117 = vmatpush2.bf16.msra.mxu0 %v3033
    %3118 = vmatprep.subr.bf16.mxu0 0
    %3119 = vmatpush2.bf16.msra.mxu0 %v3032
    %3120 = vmatprep.mubr.bf16.mxu0 %v752
    %3121 = vmatmul.mubr.bf16.gmra.mxu0 %v751
    %v3122 = vpop.f32.mrf.mxu0
    %v3123 = vadd.f32 %v2894, %v3122
    %v3124 = vpop.f32.mrf.mxu0
    %v3125 = vpop.f32.mrf.mxu0
    %v3126 = vpop.f32.mrf.mxu0
    %3127 = vdwg.mxu0
    %3128 = vmatprep.subr.bf16.mxu0 0
    %3129 = vmatpush1.bf16.msra.mxu0 %v3047
    %3130 = vmatprep.subr.bf16.mxu0 0
    %3131 = vmatpush1.bf16.msra.mxu0 %v3046
    %3132 = vmatprep.subr.bf16.mxu0 0
    %3133 = vmatpush1.bf16.msra.mxu0 %v3045
    %3134 = vmatprep.subr.bf16.mxu0 0
    %3135 = vmatpush1.bf16.msra.mxu0 %v3044
    %3136 = vmatprep.subr.bf16.mxu0 0
    %3137 = vmatpush1.bf16.msra.mxu0 %v3043
    %3138 = vmatprep.subr.bf16.mxu0 0
    %3139 = vmatpush1.bf16.msra.mxu0 %v3042
    %3140 = vmatprep.subr.bf16.mxu0 0
    %3141 = vmatpush1.bf16.msra.mxu0 %v3041
    %3142 = vmatprep.subr.bf16.mxu0 0
    %3143 = vmatpush1.bf16.msra.mxu0 %v3040
    %3144 = vmatprep.subr.bf16.mxu0 0
    %3145 = vmatpush2.bf16.msra.mxu0 %v3055
    %3146 = vmatprep.subr.bf16.mxu0 0
    %3147 = vmatpush2.bf16.msra.mxu0 %v3054
    %3148 = vmatprep.subr.bf16.mxu0 0
    %3149 = vmatpush2.bf16.msra.mxu0 %v3053
    %3150 = vmatprep.subr.bf16.mxu0 0
    %3151 = vmatpush2.bf16.msra.mxu0 %v3052
    %3152 = vmatprep.subr.bf16.mxu0 0
    %3153 = vmatpush2.bf16.msra.mxu0 %v3051
    %3154 = vmatprep.subr.bf16.mxu0 0
    %3155 = vmatpush2.bf16.msra.mxu0 %v3050
    %3156 = vmatprep.subr.bf16.mxu0 0
    %3157 = vmatpush2.bf16.msra.mxu0 %v3049
    %3158 = vmatprep.subr.bf16.mxu0 0
    %3159 = vmatpush2.bf16.msra.mxu0 %v3048
    %3160 = vmatprep.mubr.bf16.mxu0 %v754
    %3161 = vmatmul.mubr.bf16.gmra.mxu0 %v753
    %v3162 = vpop.f32.mrf.mxu0
    %v3163 = vadd.f32 %v3123, %v3162
    %v3164 = vpop.f32.mrf.mxu0
    %v3165 = vpop.f32.mrf.mxu0
    %v3166 = vpop.f32.mrf.mxu0
    %3167 = vdwg.mxu0
    %v3168 = vtanh.pop %v3163
    %vm3169 = vcmask 130048
    %3170 = vst.msk [vmem:[#allocation11 + $0x30] sm:$0xff] %vm3169, %v3168
    // Predicated region
    $region50: #{generator_forward.1} parent=1 // pred_check
      _
    $region51: #{generator_forward.1} parent=1 // pred_check_branch
      %3172 = sbr.rel (0) target = $region53
    $region52: #{generator_forward.1} parent=1 // pred_region
      %s3174 = ssub.s32 896, 896
      %3175 = vsyncadd [#allocation4], %s3174
      %s3177 = sshll.u32 [#allocation11], 4
      %s3178 = int_to_ptr.vmem [resolvable:$true] %s3177
      %3180 = dma.vmem_to_hbm [thread:$0]  %s3178, 896, %s7, [#allocation4]
    $region53: #{generator_forward.1} parent=1 // pred_fallthru
      _
    // Predicated region
    $region54: #{generator_forward.1} parent=1 // pred_check
      _
    $region55: #{generator_forward.1} parent=1 // pred_check_branch
      %3182 = sbr.rel (0) target = $region57
    $region56: #{generator_forward.1} parent=1 // pred_region
      %3183 = dma.done [#allocation4], 896
    $region57: #{generator_forward.1} parent=1 // pred_fallthru
      _
    %3184 = vsyncpa [#allocation3], 1
    %3185 = vsyncpa [#allocation6], 1
    %3186 = vsyncpa [#allocation9], 1
    %3187 = vsyncpa [#allocation4], 1

</llo_original>
